<compile_context>
chip_gen: v7x
topology: tpu7x:2x2x1
jax: 0.10.0
libtpu: 0.0.40
codegen_flags: <defaults>
</compile_context>

<pallas_src>
import jax
import jax.numpy as jnp
from jax.experimental import pallas as pl
from jax.experimental.pallas import tpu as pltpu

# ---------------- config (small, synthetic) ----------------
B = 2           # batch
S = 8           # sequence length (= max_position_embeddings)
BS = B * S      # fused batch*seq rows
D = 32          # hidden size
H = 4           # attention heads
HD = D // H     # head dim
I = 64          # intermediate (MLP) size
V = 64          # vocab size
P = 16          # projection dim
L = 2           # number of encoder layers
EPS = 1e-5
NEG_INF = -1e9


# ---------------- fused Pallas kernel ----------------
def _layernorm(x, w, b):
    mu = jnp.mean(x, axis=-1, keepdims=True)
    var = jnp.mean((x - mu) ** 2, axis=-1, keepdims=True)
    return (x - mu) * jax.lax.rsqrt(var + EPS) * w + b


def clip_text_kernel(eos_ref,                       # scalar prefetch: (B,) int32 in SMEM
                     x_ref, mask_ref,
                     wqkv_ref, bqkv_ref, wo_ref, vecs_ref,
                     w1_ref, b1_ref, w2_ref,
                     fln_ref, wproj_ref,
                     o_ref,
                     h_ref):
    # Whole batch processed in one grid step as a (B*S, D) slab.
    x = x_ref[...]                                   # (BS, D) f32

    # Block-diagonal causal + padding additive bias, built once from 2-D iotas.
    key_ok = mask_ref[...] > 0                       # (1, BS) bool
    gq = jax.lax.broadcasted_iota(jnp.int32, (BS, BS), 0)
    gk = jax.lax.broadcasted_iota(jnp.int32, (BS, BS), 1)
    same_b = None
    for b in range(B):
        in_q = (gq >= b * S) & (gq < (b + 1) * S)
        in_k = (gk >= b * S) & (gk < (b + 1) * S)
        blk = in_q & in_k
        same_b = blk if same_b is None else (same_b | blk)
    allow = same_b & (gq >= gk) & key_ok             # (BS, BS) bool
    bias = jnp.where(allow, 0.0, NEG_INF).astype(jnp.float32)

    # L is tiny: statically unrolled layer loop; all stacked weights stay in VMEM.
    # TODO(synk): at real CLIP sizes (D=512, I=2048, L=12) switch to a grid axis
    # over layers with pl.Buffered(2) weight streaming (mandatory on v7x 64 MiB VMEM).
    for l in range(L):
        ln1w = vecs_ref[l, 0:1]; ln1b = vecs_ref[l, 1:2]
        ln2w = vecs_ref[l, 2:3]; ln2b = vecs_ref[l, 3:4]
        bo = vecs_ref[l, 4:5];   b2 = vecs_ref[l, 5:6]

        # ---- self attention (pre-LN); 1/sqrt(HD) folded into the q third of Wqkv ----
        hn = _layernorm(x, ln1w, ln1b)
        qkv = jnp.dot(hn.astype(jnp.bfloat16), wqkv_ref[l],
                      preferred_element_type=jnp.float32) + bqkv_ref[l]    # (BS, 3D)

        ctx_heads = []
        for h in range(H):
            q_h = qkv[:, h * HD:(h + 1) * HD].astype(jnp.bfloat16)          # (BS, HD)
            k_h = qkv[:, D + h * HD:D + (h + 1) * HD].astype(jnp.bfloat16)
            v_h = qkv[:, 2 * D + h * HD:2 * D + (h + 1) * HD].astype(jnp.bfloat16)

            s = jax.lax.dot_general(q_h, k_h, (((1,), (1,)), ((), ())),
                                    preferred_element_type=jnp.float32)     # (BS, BS)
            s = s + bias
            s = s - jnp.max(s, axis=-1, keepdims=True)
            p = jnp.exp(s)
            p = p * pl.reciprocal(jnp.sum(p, axis=-1, keepdims=True), approx=True)
            ctx_heads.append(jnp.dot(p.astype(jnp.bfloat16), v_h,
                                     preferred_element_type=jnp.float32))   # (BS, HD)
        ctx = jnp.concatenate(ctx_heads, axis=-1)                           # (BS, D)
        x = x + jnp.dot(ctx.astype(jnp.bfloat16), wo_ref[l],
                        preferred_element_type=jnp.float32) + bo

        # ---- MLP (pre-LN, quick_gelu) ----
        hn = _layernorm(x, ln2w, ln2b)
        h1 = jnp.dot(hn.astype(jnp.bfloat16), w1_ref[l],
                     preferred_element_type=jnp.float32) + b1_ref[l]        # (BS, I)
        h1 = h1 * jax.nn.sigmoid(1.702 * h1)                                # quick_gelu
        x = x + jnp.dot(h1.astype(jnp.bfloat16), w2_ref[l],
                        preferred_element_type=jnp.float32) + b2

    # ---- epilogue: pool EOS rows (scalar-prefetched indices), LN only those rows,
    #      then project.  LN is row-wise so this matches LN-then-gather exactly. ----
    h_ref[...] = x
    rows = []
    for b in range(B):
        idx = b * S + eos_ref[b]
        rows.append(h_ref[pl.ds(idx, 1), :])                                # (1, D)
    pooled = jnp.concatenate(rows, axis=0)                                  # (B, D)
    pooled = _layernorm(pooled, fln_ref[0:1], fln_ref[1:2])
    o_ref[...] = jnp.dot(pooled.astype(jnp.bfloat16), wproj_ref[...],
                         preferred_element_type=jnp.float32)                # (B, P)


# ---------------- wrapper ----------------
def clip_text_forward(p, hidden_flat, mask_i32, eos_idx):
    def const_map(shape):
        nd = len(shape)
        return pl.BlockSpec(shape, lambda i, eos, _nd=nd: (0,) * _nd)

    grid_spec = pltpu.PrefetchScalarGridSpec(
        num_scalar_prefetch=1,
        grid=(1,),
        in_specs=[
            const_map((BS, D)),                 # hidden
            const_map((1, BS)),                 # attention mask (int32 row)
            const_map(p["wqkv"].shape),
            const_map(p["bqkv"].shape),
            const_map(p["wo"].shape),
            const_map(p["vecs"].shape),
            const_map(p["w1"].shape),
            const_map(p["b1"].shape),
            const_map(p["w2"].shape),
            const_map(p["fln"].shape),
            const_map(p["wproj"].shape),
        ],
        out_specs=pl.BlockSpec((B, P), lambda i, eos: (0, 0)),
        scratch_shapes=[pltpu.VMEM((BS, D), jnp.float32)],
    )
    return pl.pallas_call(
        clip_text_kernel,
        out_shape=jax.ShapeDtypeStruct((B, P), jnp.float32),
        grid_spec=grid_spec,
        compiler_params=pltpu.CompilerParams(
            dimension_semantics=("arbitrary",)),
    )(eos_idx, hidden_flat, mask_i32,
      p["wqkv"], p["bqkv"], p["wo"], p["vecs"],
      p["w1"], p["b1"], p["w2"], p["fln"], p["wproj"])


# ---------------- parameter init (PyTorch layout) + host-side prep ----------------
def init_params(key):
    ks = iter(jax.random.split(key, 4 + L * 8))
    std = 0.02
    params = {
        "tok_emb": jax.random.normal(next(ks), (V, D), jnp.float32) * std,
        "pos_emb": jax.random.normal(next(ks), (S, D), jnp.float32) * std,
    }
    layers = []
    for _ in range(L):
        layers.append((
            jnp.ones((D,), jnp.float32),                                  # ln1 w
            jnp.zeros((D,), jnp.float32),                                 # ln1 b
            jax.random.normal(next(ks), (D, D), jnp.float32) * std,       # wq (out,in)
            jnp.zeros((D,), jnp.float32),                                 # bq
            jax.random.normal(next(ks), (D, D), jnp.float32) * std,       # wk
            jnp.zeros((D,), jnp.float32),                                 # bk
            jax.random.normal(next(ks), (D, D), jnp.float32) * std,       # wv
            jnp.zeros((D,), jnp.float32),                                 # bv
            jax.random.normal(next(ks), (D, D), jnp.float32) * std,       # wo
            jnp.zeros((D,), jnp.float32),                                 # bo
            jnp.ones((D,), jnp.float32),                                  # ln2 w
            jnp.zeros((D,), jnp.float32),                                 # ln2 b
            jax.random.normal(next(ks), (I, D), jnp.float32) * std,       # fc1 w (out,in)
            jnp.zeros((I,), jnp.float32),                                 # fc1 b
            jax.random.normal(next(ks), (D, I), jnp.float32) * std,       # fc2 w (out,in)
            jnp.zeros((D,), jnp.float32),                                 # fc2 b
        ))
    params["layers"] = layers
    params["final_ln_w"] = jnp.ones((D,), jnp.float32)
    params["final_ln_b"] = jnp.zeros((D,), jnp.float32)
    params["text_proj"] = jax.random.normal(next(ks), (P, D), jnp.float32) * std
    return params


def prepare_params(raw):
    """Transpose nn.Linear weights to (in,out), fuse QKV, fold the q scale,
    stack over layers, cast matmul weights to bf16."""
    scale = 1.0 / (HD ** 0.5)
    wqkv, bqkv, wos, vecs, w1s, b1s, w2s = [], [], [], [], [], [], []
    for lp in raw["layers"]:
        (ln1w, ln1b, wq, bq, wk, bk, wv, bv, wo, bo,
         ln2w, ln2b, w1, b1, w2, b2) = lp
        wqkv.append(jnp.concatenate([wq.T * scale, wk.T, wv.T], axis=1))    # (D, 3D)
        bqkv.append(jnp.concatenate([bq * scale, bk, bv]).reshape(1, 3 * D))
        wos.append(wo.T)                                                    # (D, D)
        vecs.append(jnp.stack([ln1w, ln1b, ln2w, ln2b, bo, b2]))            # (6, D)
        w1s.append(w1.T)                                                    # (D, I)
        b1s.append(b1.reshape(1, I))
        w2s.append(w2.T)                                                    # (I, D)
    return {
        "tok_emb": raw["tok_emb"],
        "pos_emb": raw["pos_emb"],
        "wqkv": jnp.stack(wqkv).astype(jnp.bfloat16),      # (L, D, 3D)
        "bqkv": jnp.stack(bqkv),                           # (L, 1, 3D) f32
        "wo": jnp.stack(wos).astype(jnp.bfloat16),         # (L, D, D)
        "vecs": jnp.stack(vecs),                           # (L, 6, D) f32
        "w1": jnp.stack(w1s).astype(jnp.bfloat16),         # (L, D, I)
        "b1": jnp.stack(b1s),                              # (L, 1, I) f32
        "w2": jnp.stack(w2s).astype(jnp.bfloat16),         # (L, I, D)
        "fln": jnp.stack([raw["final_ln_w"], raw["final_ln_b"]]),   # (2, D) f32
        "wproj": raw["text_proj"].T.astype(jnp.bfloat16),  # (D, P)
    }


# ---------------- full forward (get_text_features) ----------------
@jax.jit
def clip_get_text_features(params, input_ids, attention_mask=None,
                           position_ids=None):
    if position_ids is None:
        position_ids = jnp.broadcast_to(jnp.arange(S, dtype=jnp.int32), (B, S))

    # embeddings (glue: gather lookups stay in plain JAX)
    hidden = (jnp.take(params["tok_emb"], input_ids, axis=0)
              + jnp.take(params["pos_emb"], position_ids, axis=0))
    hidden_flat = hidden.reshape(BS, D).astype(jnp.float32)

    if attention_mask is None:
        attention_mask = jnp.ones((B, S), jnp.int32)
    mask_i32 = attention_mask.astype(jnp.int32).reshape(1, BS)

    # pooled output picks the highest-id token (HF CLIP pre-eos_token_id behavior)
    # TODO(synk): newer HF CLIP pools on (input_ids == eos_token_id); argmax matches
    # the older behavior and assumes eos has the largest token id.
    eos_idx = jnp.argmax(input_ids, axis=-1).astype(jnp.int32)   # (B,)

    return clip_text_forward(params, hidden_flat, mask_i32, eos_idx)   # (B, P)


if __name__ == "__main__":
    key = jax.random.PRNGKey(0)
    pkey, ikey = jax.random.split(key)
    params = prepare_params(init_params(pkey))

    input_ids = jax.random.randint(ikey, (B, S), 0, V, dtype=jnp.int32)
    attention_mask = jnp.ones((B, S), jnp.int32)

    feats = clip_get_text_features(params, input_ids, attention_mask)
    jax.block_until_ready(feats)
    assert feats.shape == (B, P) and feats.dtype == jnp.float32
    assert bool(jnp.all(jnp.isfinite(feats)))
    print("KERNEL_OK")
</pallas_src>

<mosaic_0001>
module attributes {stable_mosaic.version = 11 : i64} {
  func.func @clip_text_kernel(%arg0: i32, %arg1: memref<2xi32, #tpu.memory_space<smem>>, %arg2: memref<16x32xf32, #tpu.memory_space<vmem>>, %arg3: memref<1x16xi32, #tpu.memory_space<vmem>>, %arg4: memref<2x32x96xbf16, #tpu.memory_space<vmem>>, %arg5: memref<2x1x96xf32, #tpu.memory_space<vmem>>, %arg6: memref<2x32x32xbf16, #tpu.memory_space<vmem>>, %arg7: memref<2x6x32xf32, #tpu.memory_space<vmem>>, %arg8: memref<2x32x64xbf16, #tpu.memory_space<vmem>>, %arg9: memref<2x1x64xf32, #tpu.memory_space<vmem>>, %arg10: memref<2x64x32xbf16, #tpu.memory_space<vmem>>, %arg11: memref<2x32xf32, #tpu.memory_space<vmem>>, %arg12: memref<32x16xbf16, #tpu.memory_space<vmem>>, %arg13: memref<2x16xf32, #tpu.memory_space<vmem>>, %arg14: memref<16x32xf32, #tpu.memory_space<vmem>>) attributes {dimension_semantics = [#tpu.dimension_semantics<arbitrary>], iteration_bounds = array<i64: 1>, scalar_prefetch = 1 : i64, scratch_operands = 1 : i64, tpu.core_type = #tpu.core_type<tc>, window_params = [{pipeline_mode = #tpu.pipeline_mode<synchronous>, transform_indices = @transform_0, window_bounds = array<i64: 16, 32>}, {pipeline_mode = #tpu.pipeline_mode<synchronous>, transform_indices = @transform_1, window_bounds = array<i64: 1, 16>}, {pipeline_mode = #tpu.pipeline_mode<synchronous>, transform_indices = @transform_2, window_bounds = array<i64: 2, 32, 96>}, {pipeline_mode = #tpu.pipeline_mode<synchronous>, transform_indices = @transform_3, window_bounds = array<i64: 2, 1, 96>}, {pipeline_mode = #tpu.pipeline_mode<synchronous>, transform_indices = @transform_4, window_bounds = array<i64: 2, 32, 32>}, {pipeline_mode = #tpu.pipeline_mode<synchronous>, transform_indices = @transform_5, window_bounds = array<i64: 2, 6, 32>}, {pipeline_mode = #tpu.pipeline_mode<synchronous>, transform_indices = @transform_6, window_bounds = array<i64: 2, 32, 64>}, {pipeline_mode = #tpu.pipeline_mode<synchronous>, transform_indices = @transform_7, window_bounds = array<i64: 2, 1, 64>}, {pipeline_mode = #tpu.pipeline_mode<synchronous>, transform_indices = @transform_8, window_bounds = array<i64: 2, 64, 32>}, {pipeline_mode = #tpu.pipeline_mode<synchronous>, transform_indices = @transform_9, window_bounds = array<i64: 2, 32>}, {pipeline_mode = #tpu.pipeline_mode<synchronous>, transform_indices = @transform_10, window_bounds = array<i64: 32, 16>}, {pipeline_mode = #tpu.pipeline_mode<synchronous>, transform_indices = @transform_11, window_bounds = array<i64: 2, 16>}]} {
    %c0 = arith.constant 0 : index
    %c0_0 = arith.constant 0 : index
    %0 = vector.load %arg2[%c0, %c0_0] : memref<16x32xf32, #tpu.memory_space<vmem>>, vector<16x32xf32>
    %c0_1 = arith.constant 0 : index
    %c0_2 = arith.constant 0 : index
    %1 = vector.load %arg3[%c0_1, %c0_2] : memref<1x16xi32, #tpu.memory_space<vmem>>, vector<1x16xi32>
    %c0_i32 = arith.constant 0 : i32
    %2 = vector.broadcast %c0_i32 : i32 to vector<1x16xi32>
    %3 = arith.cmpi sgt, %1, %2 : vector<1x16xi32>
    %4 = tpu.iota {dimensions = array<i32: 0>} : vector<16x16xi32>
    %5 = tpu.iota {dimensions = array<i32: 1>} : vector<16x16xi32>
    %c0_i32_3 = arith.constant 0 : i32
    %6 = vector.broadcast %c0_i32_3 : i32 to vector<16x16xi32>
    %7 = arith.cmpi sge, %4, %6 : vector<16x16xi32>
    %c8_i32 = arith.constant 8 : i32
    %8 = vector.broadcast %c8_i32 : i32 to vector<16x16xi32>
    %9 = arith.cmpi slt, %4, %8 : vector<16x16xi32>
    %10 = arith.andi %7, %9 : vector<16x16xi1>
    %c0_i32_4 = arith.constant 0 : i32
    %11 = vector.broadcast %c0_i32_4 : i32 to vector<16x16xi32>
    %12 = arith.cmpi sge, %5, %11 : vector<16x16xi32>
    %c8_i32_5 = arith.constant 8 : i32
    %13 = vector.broadcast %c8_i32_5 : i32 to vector<16x16xi32>
    %14 = arith.cmpi slt, %5, %13 : vector<16x16xi32>
    %15 = arith.andi %12, %14 : vector<16x16xi1>
    %16 = arith.andi %10, %15 : vector<16x16xi1>
    %c8_i32_6 = arith.constant 8 : i32
    %17 = vector.broadcast %c8_i32_6 : i32 to vector<16x16xi32>
    %18 = arith.cmpi sge, %4, %17 : vector<16x16xi32>
    %c16_i32 = arith.constant 16 : i32
    %19 = vector.broadcast %c16_i32 : i32 to vector<16x16xi32>
    %20 = arith.cmpi slt, %4, %19 : vector<16x16xi32>
    %21 = arith.andi %18, %20 : vector<16x16xi1>
    %c8_i32_7 = arith.constant 8 : i32
    %22 = vector.broadcast %c8_i32_7 : i32 to vector<16x16xi32>
    %23 = arith.cmpi sge, %5, %22 : vector<16x16xi32>
    %c16_i32_8 = arith.constant 16 : i32
    %24 = vector.broadcast %c16_i32_8 : i32 to vector<16x16xi32>
    %25 = arith.cmpi slt, %5, %24 : vector<16x16xi32>
    %26 = arith.andi %23, %25 : vector<16x16xi1>
    %27 = arith.andi %21, %26 : vector<16x16xi1>
    %28 = arith.ori %16, %27 : vector<16x16xi1>
    %29 = arith.cmpi sge, %4, %5 : vector<16x16xi32>
    %30 = arith.andi %28, %29 : vector<16x16xi1>
    %31 = vector.broadcast %3 : vector<1x16xi1> to vector<16x16xi1>
    %32 = arith.andi %30, %31 : vector<16x16xi1>
    %cst = arith.constant 0.000000e+00 : f32
    %cst_9 = arith.constant -1.000000e+09 : f32
    %33 = vector.broadcast %cst : f32 to vector<16x16xf32>
    %34 = vector.broadcast %cst_9 : f32 to vector<16x16xf32>
    %35 = arith.select %32, %33, %34 : vector<16x16xi1>, vector<16x16xf32>
    %c0_10 = arith.constant 0 : index
    %c0_11 = arith.constant 0 : index
    %c0_12 = arith.constant 0 : index
    %36 = vector.load %arg7[%c0_10, %c0_11, %c0_12] : memref<2x6x32xf32, #tpu.memory_space<vmem>>, vector<1x1x32xf32>
    %37 = vector.shape_cast %36 : vector<1x1x32xf32> to vector<1x32xf32>
    %c0_13 = arith.constant 0 : index
    %c1 = arith.constant 1 : index
    %c0_14 = arith.constant 0 : index
    %38 = vector.load %arg7[%c0_13, %c1, %c0_14] : memref<2x6x32xf32, #tpu.memory_space<vmem>>, vector<1x1x32xf32>
    %39 = vector.shape_cast %38 : vector<1x1x32xf32> to vector<1x32xf32>
    %c0_15 = arith.constant 0 : index
    %c2 = arith.constant 2 : index
    %c0_16 = arith.constant 0 : index
    %40 = vector.load %arg7[%c0_15, %c2, %c0_16] : memref<2x6x32xf32, #tpu.memory_space<vmem>>, vector<1x1x32xf32>
    %41 = vector.shape_cast %40 : vector<1x1x32xf32> to vector<1x32xf32>
    %c0_17 = arith.constant 0 : index
    %c3 = arith.constant 3 : index
    %c0_18 = arith.constant 0 : index
    %42 = vector.load %arg7[%c0_17, %c3, %c0_18] : memref<2x6x32xf32, #tpu.memory_space<vmem>>, vector<1x1x32xf32>
    %43 = vector.shape_cast %42 : vector<1x1x32xf32> to vector<1x32xf32>
    %c0_19 = arith.constant 0 : index
    %c4 = arith.constant 4 : index
    %c0_20 = arith.constant 0 : index
    %44 = vector.load %arg7[%c0_19, %c4, %c0_20] : memref<2x6x32xf32, #tpu.memory_space<vmem>>, vector<1x1x32xf32>
    %45 = vector.shape_cast %44 : vector<1x1x32xf32> to vector<1x32xf32>
    %c0_21 = arith.constant 0 : index
    %c5 = arith.constant 5 : index
    %c0_22 = arith.constant 0 : index
    %46 = vector.load %arg7[%c0_21, %c5, %c0_22] : memref<2x6x32xf32, #tpu.memory_space<vmem>>, vector<1x1x32xf32>
    %47 = vector.shape_cast %46 : vector<1x1x32xf32> to vector<1x32xf32>
    %cst_23 = arith.constant dense<0.000000e+00> : vector<16xf32>
    %48 = vector.multi_reduction <add>, %0, %cst_23 [1] : vector<16x32xf32> to vector<16xf32>
    %49 = vector.shape_cast %48 : vector<16xf32> to vector<16x1xf32>
    %cst_24 = arith.constant 3.200000e+01 : f32
    %50 = vector.broadcast %cst_24 : f32 to vector<16x1xf32>
    %51 = arith.divf %49, %50 : vector<16x1xf32>
    %52 = vector.broadcast %51 : vector<16x1xf32> to vector<16x32xf32>
    %53 = arith.subf %0, %52 : vector<16x32xf32>
    %54 = arith.mulf %53, %53 : vector<16x32xf32>
    %cst_25 = arith.constant dense<0.000000e+00> : vector<16xf32>
    %55 = vector.multi_reduction <add>, %54, %cst_25 [1] : vector<16x32xf32> to vector<16xf32>
    %56 = vector.shape_cast %55 : vector<16xf32> to vector<16x1xf32>
    %cst_26 = arith.constant 3.200000e+01 : f32
    %57 = vector.broadcast %cst_26 : f32 to vector<16x1xf32>
    %58 = arith.divf %56, %57 : vector<16x1xf32>
    %59 = vector.broadcast %51 : vector<16x1xf32> to vector<16x32xf32>
    %60 = arith.subf %0, %59 : vector<16x32xf32>
    %cst_27 = arith.constant 9.99999974E-6 : f32
    %61 = vector.broadcast %cst_27 : f32 to vector<16x1xf32>
    %62 = arith.addf %58, %61 : vector<16x1xf32>
    %63 = math.rsqrt %62 : vector<16x1xf32>
    %64 = vector.broadcast %63 : vector<16x1xf32> to vector<16x32xf32>
    %65 = arith.mulf %60, %64 : vector<16x32xf32>
    %66 = vector.broadcast %37 : vector<1x32xf32> to vector<16x32xf32>
    %67 = arith.mulf %65, %66 : vector<16x32xf32>
    %68 = vector.broadcast %39 : vector<1x32xf32> to vector<16x32xf32>
    %69 = arith.addf %67, %68 : vector<16x32xf32>
    %70 = arith.truncf %69 : vector<16x32xf32> to vector<16x32xbf16>
    %c0_28 = arith.constant 0 : index
    %c0_29 = arith.constant 0 : index
    %c0_30 = arith.constant 0 : index
    %71 = vector.load %arg4[%c0_28, %c0_29, %c0_30] : memref<2x32x96xbf16, #tpu.memory_space<vmem>>, vector<1x32x96xbf16>
    %72 = vector.shape_cast %71 : vector<1x32x96xbf16> to vector<32x96xbf16>
    %cst_31 = arith.constant dense<0.000000e+00> : vector<16x96xf32>
    %73 = tpu.matmul %70, %72, %cst_31 {dimension_numbers = #tpu.dot_dimension_numbers<[1], [0], [0], [1], [0, 0, 1, 1], [], []>} : vector<16x32xbf16>, vector<32x96xbf16>, vector<16x96xf32> -> vector<16x96xf32>
    %c0_32 = arith.constant 0 : index
    %c0_33 = arith.constant 0 : index
    %c0_34 = arith.constant 0 : index
    %74 = vector.load %arg5[%c0_32, %c0_33, %c0_34] : memref<2x1x96xf32, #tpu.memory_space<vmem>>, vector<1x1x96xf32>
    %75 = vector.shape_cast %74 : vector<1x1x96xf32> to vector<1x96xf32>
    %76 = vector.broadcast %75 : vector<1x96xf32> to vector<16x96xf32>
    %77 = arith.addf %73, %76 : vector<16x96xf32>
    %78 = vector.extract_strided_slice %77 {offsets = [0, 0], sizes = [16, 8], strides = [1, 1]} : vector<16x96xf32> to vector<16x8xf32>
    %79 = arith.truncf %78 : vector<16x8xf32> to vector<16x8xbf16>
    %80 = vector.extract_strided_slice %77 {offsets = [0, 32], sizes = [16, 8], strides = [1, 1]} : vector<16x96xf32> to vector<16x8xf32>
    %81 = arith.truncf %80 : vector<16x8xf32> to vector<16x8xbf16>
    %82 = vector.extract_strided_slice %77 {offsets = [0, 64], sizes = [16, 8], strides = [1, 1]} : vector<16x96xf32> to vector<16x8xf32>
    %83 = arith.truncf %82 : vector<16x8xf32> to vector<16x8xbf16>
    %cst_35 = arith.constant dense<0.000000e+00> : vector<16x16xf32>
    %84 = tpu.matmul %79, %81, %cst_35 {dimension_numbers = #tpu.dot_dimension_numbers<[1], [1], [0], [0], [0, 0, 1, 0], [], []>} : vector<16x8xbf16>, vector<16x8xbf16>, vector<16x16xf32> -> vector<16x16xf32>
    %85 = arith.addf %84, %35 : vector<16x16xf32>
    %cst_36 = arith.constant dense<0xFF800000> : vector<16xf32>
    %86 = vector.multi_reduction <maximumf>, %85, %cst_36 [1] : vector<16x16xf32> to vector<16xf32>
    %87 = vector.shape_cast %86 : vector<16xf32> to vector<16x1xf32>
    %88 = vector.broadcast %87 : vector<16x1xf32> to vector<16x16xf32>
    %89 = arith.subf %85, %88 : vector<16x16xf32>
    %90 = math.exp %89 : vector<16x16xf32>
    %cst_37 = arith.constant dense<0.000000e+00> : vector<16xf32>
    %91 = vector.multi_reduction <add>, %90, %cst_37 [1] : vector<16x16xf32> to vector<16xf32>
    %92 = vector.shape_cast %91 : vector<16xf32> to vector<16x1xf32>
    %93 = tpu.reciprocal %92 {approx = true} : vector<16x1xf32> -> vector<16x1xf32>
    %94 = vector.broadcast %93 : vector<16x1xf32> to vector<16x16xf32>
    %95 = arith.mulf %90, %94 : vector<16x16xf32>
    %96 = arith.truncf %95 : vector<16x16xf32> to vector<16x16xbf16>
    %cst_38 = arith.constant dense<0.000000e+00> : vector<16x8xf32>
    %97 = tpu.matmul %96, %83, %cst_38 {dimension_numbers = #tpu.dot_dimension_numbers<[1], [0], [0], [1], [0, 0, 1, 1], [], []>} : vector<16x16xbf16>, vector<16x8xbf16>, vector<16x8xf32> -> vector<16x8xf32>
    %98 = vector.extract_strided_slice %77 {offsets = [0, 8], sizes = [16, 8], strides = [1, 1]} : vector<16x96xf32> to vector<16x8xf32>
    %99 = arith.truncf %98 : vector<16x8xf32> to vector<16x8xbf16>
    %100 = vector.extract_strided_slice %77 {offsets = [0, 40], sizes = [16, 8], strides = [1, 1]} : vector<16x96xf32> to vector<16x8xf32>
    %101 = arith.truncf %100 : vector<16x8xf32> to vector<16x8xbf16>
    %102 = vector.extract_strided_slice %77 {offsets = [0, 72], sizes = [16, 8], strides = [1, 1]} : vector<16x96xf32> to vector<16x8xf32>
    %103 = arith.truncf %102 : vector<16x8xf32> to vector<16x8xbf16>
    %cst_39 = arith.constant dense<0.000000e+00> : vector<16x16xf32>
    %104 = tpu.matmul %99, %101, %cst_39 {dimension_numbers = #tpu.dot_dimension_numbers<[1], [1], [0], [0], [0, 0, 1, 0], [], []>} : vector<16x8xbf16>, vector<16x8xbf16>, vector<16x16xf32> -> vector<16x16xf32>
    %105 = arith.addf %104, %35 : vector<16x16xf32>
    %cst_40 = arith.constant dense<0xFF800000> : vector<16xf32>
    %106 = vector.multi_reduction <maximumf>, %105, %cst_40 [1] : vector<16x16xf32> to vector<16xf32>
    %107 = vector.shape_cast %106 : vector<16xf32> to vector<16x1xf32>
    %108 = vector.broadcast %107 : vector<16x1xf32> to vector<16x16xf32>
    %109 = arith.subf %105, %108 : vector<16x16xf32>
    %110 = math.exp %109 : vector<16x16xf32>
    %cst_41 = arith.constant dense<0.000000e+00> : vector<16xf32>
    %111 = vector.multi_reduction <add>, %110, %cst_41 [1] : vector<16x16xf32> to vector<16xf32>
    %112 = vector.shape_cast %111 : vector<16xf32> to vector<16x1xf32>
    %113 = tpu.reciprocal %112 {approx = true} : vector<16x1xf32> -> vector<16x1xf32>
    %114 = vector.broadcast %113 : vector<16x1xf32> to vector<16x16xf32>
    %115 = arith.mulf %110, %114 : vector<16x16xf32>
    %116 = arith.truncf %115 : vector<16x16xf32> to vector<16x16xbf16>
    %cst_42 = arith.constant dense<0.000000e+00> : vector<16x8xf32>
    %117 = tpu.matmul %116, %103, %cst_42 {dimension_numbers = #tpu.dot_dimension_numbers<[1], [0], [0], [1], [0, 0, 1, 1], [], []>} : vector<16x16xbf16>, vector<16x8xbf16>, vector<16x8xf32> -> vector<16x8xf32>
    %118 = vector.extract_strided_slice %77 {offsets = [0, 16], sizes = [16, 8], strides = [1, 1]} : vector<16x96xf32> to vector<16x8xf32>
    %119 = arith.truncf %118 : vector<16x8xf32> to vector<16x8xbf16>
    %120 = vector.extract_strided_slice %77 {offsets = [0, 48], sizes = [16, 8], strides = [1, 1]} : vector<16x96xf32> to vector<16x8xf32>
    %121 = arith.truncf %120 : vector<16x8xf32> to vector<16x8xbf16>
    %122 = vector.extract_strided_slice %77 {offsets = [0, 80], sizes = [16, 8], strides = [1, 1]} : vector<16x96xf32> to vector<16x8xf32>
    %123 = arith.truncf %122 : vector<16x8xf32> to vector<16x8xbf16>
    %cst_43 = arith.constant dense<0.000000e+00> : vector<16x16xf32>
    %124 = tpu.matmul %119, %121, %cst_43 {dimension_numbers = #tpu.dot_dimension_numbers<[1], [1], [0], [0], [0, 0, 1, 0], [], []>} : vector<16x8xbf16>, vector<16x8xbf16>, vector<16x16xf32> -> vector<16x16xf32>
    %125 = arith.addf %124, %35 : vector<16x16xf32>
    %cst_44 = arith.constant dense<0xFF800000> : vector<16xf32>
    %126 = vector.multi_reduction <maximumf>, %125, %cst_44 [1] : vector<16x16xf32> to vector<16xf32>
    %127 = vector.shape_cast %126 : vector<16xf32> to vector<16x1xf32>
    %128 = vector.broadcast %127 : vector<16x1xf32> to vector<16x16xf32>
    %129 = arith.subf %125, %128 : vector<16x16xf32>
    %130 = math.exp %129 : vector<16x16xf32>
    %cst_45 = arith.constant dense<0.000000e+00> : vector<16xf32>
    %131 = vector.multi_reduction <add>, %130, %cst_45 [1] : vector<16x16xf32> to vector<16xf32>
    %132 = vector.shape_cast %131 : vector<16xf32> to vector<16x1xf32>
    %133 = tpu.reciprocal %132 {approx = true} : vector<16x1xf32> -> vector<16x1xf32>
    %134 = vector.broadcast %133 : vector<16x1xf32> to vector<16x16xf32>
    %135 = arith.mulf %130, %134 : vector<16x16xf32>
    %136 = arith.truncf %135 : vector<16x16xf32> to vector<16x16xbf16>
    %cst_46 = arith.constant dense<0.000000e+00> : vector<16x8xf32>
    %137 = tpu.matmul %136, %123, %cst_46 {dimension_numbers = #tpu.dot_dimension_numbers<[1], [0], [0], [1], [0, 0, 1, 1], [], []>} : vector<16x16xbf16>, vector<16x8xbf16>, vector<16x8xf32> -> vector<16x8xf32>
    %138 = vector.extract_strided_slice %77 {offsets = [0, 24], sizes = [16, 8], strides = [1, 1]} : vector<16x96xf32> to vector<16x8xf32>
    %139 = arith.truncf %138 : vector<16x8xf32> to vector<16x8xbf16>
    %140 = vector.extract_strided_slice %77 {offsets = [0, 56], sizes = [16, 8], strides = [1, 1]} : vector<16x96xf32> to vector<16x8xf32>
    %141 = arith.truncf %140 : vector<16x8xf32> to vector<16x8xbf16>
    %142 = vector.extract_strided_slice %77 {offsets = [0, 88], sizes = [16, 8], strides = [1, 1]} : vector<16x96xf32> to vector<16x8xf32>
    %143 = arith.truncf %142 : vector<16x8xf32> to vector<16x8xbf16>
    %cst_47 = arith.constant dense<0.000000e+00> : vector<16x16xf32>
    %144 = tpu.matmul %139, %141, %cst_47 {dimension_numbers = #tpu.dot_dimension_numbers<[1], [1], [0], [0], [0, 0, 1, 0], [], []>} : vector<16x8xbf16>, vector<16x8xbf16>, vector<16x16xf32> -> vector<16x16xf32>
    %145 = arith.addf %144, %35 : vector<16x16xf32>
    %cst_48 = arith.constant dense<0xFF800000> : vector<16xf32>
    %146 = vector.multi_reduction <maximumf>, %145, %cst_48 [1] : vector<16x16xf32> to vector<16xf32>
    %147 = vector.shape_cast %146 : vector<16xf32> to vector<16x1xf32>
    %148 = vector.broadcast %147 : vector<16x1xf32> to vector<16x16xf32>
    %149 = arith.subf %145, %148 : vector<16x16xf32>
    %150 = math.exp %149 : vector<16x16xf32>
    %cst_49 = arith.constant dense<0.000000e+00> : vector<16xf32>
    %151 = vector.multi_reduction <add>, %150, %cst_49 [1] : vector<16x16xf32> to vector<16xf32>
    %152 = vector.shape_cast %151 : vector<16xf32> to vector<16x1xf32>
    %153 = tpu.reciprocal %152 {approx = true} : vector<16x1xf32> -> vector<16x1xf32>
    %154 = vector.broadcast %153 : vector<16x1xf32> to vector<16x16xf32>
    %155 = arith.mulf %150, %154 : vector<16x16xf32>
    %156 = arith.truncf %155 : vector<16x16xf32> to vector<16x16xbf16>
    %cst_50 = arith.constant dense<0.000000e+00> : vector<16x8xf32>
    %157 = tpu.matmul %156, %143, %cst_50 {dimension_numbers = #tpu.dot_dimension_numbers<[1], [0], [0], [1], [0, 0, 1, 1], [], []>} : vector<16x16xbf16>, vector<16x8xbf16>, vector<16x8xf32> -> vector<16x8xf32>
    %158 = tpu.concatenate %97, %117, %137, %157 in 1 : vector<16x8xf32>, vector<16x8xf32>, vector<16x8xf32>, vector<16x8xf32> -> vector<16x32xf32>
    %159 = arith.truncf %158 : vector<16x32xf32> to vector<16x32xbf16>
    %c0_51 = arith.constant 0 : index
    %c0_52 = arith.constant 0 : index
    %c0_53 = arith.constant 0 : index
    %160 = vector.load %arg6[%c0_51, %c0_52, %c0_53] : memref<2x32x32xbf16, #tpu.memory_space<vmem>>, vector<1x32x32xbf16>
    %161 = vector.shape_cast %160 : vector<1x32x32xbf16> to vector<32x32xbf16>
    %cst_54 = arith.constant dense<0.000000e+00> : vector<16x32xf32>
    %162 = tpu.matmul %159, %161, %cst_54 {dimension_numbers = #tpu.dot_dimension_numbers<[1], [0], [0], [1], [0, 0, 1, 1], [], []>} : vector<16x32xbf16>, vector<32x32xbf16>, vector<16x32xf32> -> vector<16x32xf32>
    %163 = arith.addf %0, %162 : vector<16x32xf32>
    %164 = vector.broadcast %45 : vector<1x32xf32> to vector<16x32xf32>
    %165 = arith.addf %163, %164 : vector<16x32xf32>
    %cst_55 = arith.constant dense<0.000000e+00> : vector<16xf32>
    %166 = vector.multi_reduction <add>, %165, %cst_55 [1] : vector<16x32xf32> to vector<16xf32>
    %167 = vector.shape_cast %166 : vector<16xf32> to vector<16x1xf32>
    %cst_56 = arith.constant 3.200000e+01 : f32
    %168 = vector.broadcast %cst_56 : f32 to vector<16x1xf32>
    %169 = arith.divf %167, %168 : vector<16x1xf32>
    %170 = vector.broadcast %169 : vector<16x1xf32> to vector<16x32xf32>
    %171 = arith.subf %165, %170 : vector<16x32xf32>
    %172 = arith.mulf %171, %171 : vector<16x32xf32>
    %cst_57 = arith.constant dense<0.000000e+00> : vector<16xf32>
    %173 = vector.multi_reduction <add>, %172, %cst_57 [1] : vector<16x32xf32> to vector<16xf32>
    %174 = vector.shape_cast %173 : vector<16xf32> to vector<16x1xf32>
    %cst_58 = arith.constant 3.200000e+01 : f32
    %175 = vector.broadcast %cst_58 : f32 to vector<16x1xf32>
    %176 = arith.divf %174, %175 : vector<16x1xf32>
    %177 = vector.broadcast %169 : vector<16x1xf32> to vector<16x32xf32>
    %178 = arith.subf %165, %177 : vector<16x32xf32>
    %cst_59 = arith.constant 9.99999974E-6 : f32
    %179 = vector.broadcast %cst_59 : f32 to vector<16x1xf32>
    %180 = arith.addf %176, %179 : vector<16x1xf32>
    %181 = math.rsqrt %180 : vector<16x1xf32>
    %182 = vector.broadcast %181 : vector<16x1xf32> to vector<16x32xf32>
    %183 = arith.mulf %178, %182 : vector<16x32xf32>
    %184 = vector.broadcast %41 : vector<1x32xf32> to vector<16x32xf32>
    %185 = arith.mulf %183, %184 : vector<16x32xf32>
    %186 = vector.broadcast %43 : vector<1x32xf32> to vector<16x32xf32>
    %187 = arith.addf %185, %186 : vector<16x32xf32>
    %188 = arith.truncf %187 : vector<16x32xf32> to vector<16x32xbf16>
    %c0_60 = arith.constant 0 : index
    %c0_61 = arith.constant 0 : index
    %c0_62 = arith.constant 0 : index
    %189 = vector.load %arg8[%c0_60, %c0_61, %c0_62] : memref<2x32x64xbf16, #tpu.memory_space<vmem>>, vector<1x32x64xbf16>
    %190 = vector.shape_cast %189 : vector<1x32x64xbf16> to vector<32x64xbf16>
    %cst_63 = arith.constant dense<0.000000e+00> : vector<16x64xf32>
    %191 = tpu.matmul %188, %190, %cst_63 {dimension_numbers = #tpu.dot_dimension_numbers<[1], [0], [0], [1], [0, 0, 1, 1], [], []>} : vector<16x32xbf16>, vector<32x64xbf16>, vector<16x64xf32> -> vector<16x64xf32>
    %c0_64 = arith.constant 0 : index
    %c0_65 = arith.constant 0 : index
    %c0_66 = arith.constant 0 : index
    %192 = vector.load %arg9[%c0_64, %c0_65, %c0_66] : memref<2x1x64xf32, #tpu.memory_space<vmem>>, vector<1x1x64xf32>
    %193 = vector.shape_cast %192 : vector<1x1x64xf32> to vector<1x64xf32>
    %194 = vector.broadcast %193 : vector<1x64xf32> to vector<16x64xf32>
    %195 = arith.addf %191, %194 : vector<16x64xf32>
    %cst_67 = arith.constant 1.702000e+00 : f32
    %196 = vector.broadcast %cst_67 : f32 to vector<16x64xf32>
    %197 = arith.mulf %196, %195 : vector<16x64xf32>
    %198 = arith.negf %197 : vector<16x64xf32>
    %199 = math.exp %198 : vector<16x64xf32>
    %cst_68 = arith.constant 1.000000e+00 : f32
    %200 = vector.broadcast %cst_68 : f32 to vector<16x64xf32>
    %201 = arith.addf %200, %199 : vector<16x64xf32>
    %202 = arith.divf %200, %201 : vector<16x64xf32>
    %203 = arith.mulf %195, %202 : vector<16x64xf32>
    %204 = arith.truncf %203 : vector<16x64xf32> to vector<16x64xbf16>
    %c0_69 = arith.constant 0 : index
    %c0_70 = arith.constant 0 : index
    %c0_71 = arith.constant 0 : index
    %205 = vector.load %arg10[%c0_69, %c0_70, %c0_71] : memref<2x64x32xbf16, #tpu.memory_space<vmem>>, vector<1x64x32xbf16>
    %206 = vector.shape_cast %205 : vector<1x64x32xbf16> to vector<64x32xbf16>
    %cst_72 = arith.constant dense<0.000000e+00> : vector<16x32xf32>
    %207 = tpu.matmul %204, %206, %cst_72 {dimension_numbers = #tpu.dot_dimension_numbers<[1], [0], [0], [1], [0, 0, 1, 1], [], []>} : vector<16x64xbf16>, vector<64x32xbf16>, vector<16x32xf32> -> vector<16x32xf32>
    %208 = arith.addf %165, %207 : vector<16x32xf32>
    %209 = vector.broadcast %47 : vector<1x32xf32> to vector<16x32xf32>
    %210 = arith.addf %208, %209 : vector<16x32xf32>
    %c1_73 = arith.constant 1 : index
    %c0_74 = arith.constant 0 : index
    %c0_75 = arith.constant 0 : index
    %211 = vector.load %arg7[%c1_73, %c0_74, %c0_75] : memref<2x6x32xf32, #tpu.memory_space<vmem>>, vector<1x1x32xf32>
    %212 = vector.shape_cast %211 : vector<1x1x32xf32> to vector<1x32xf32>
    %c1_76 = arith.constant 1 : index
    %c1_77 = arith.constant 1 : index
    %c0_78 = arith.constant 0 : index
    %213 = vector.load %arg7[%c1_76, %c1_77, %c0_78] : memref<2x6x32xf32, #tpu.memory_space<vmem>>, vector<1x1x32xf32>
    %214 = vector.shape_cast %213 : vector<1x1x32xf32> to vector<1x32xf32>
    %c1_79 = arith.constant 1 : index
    %c2_80 = arith.constant 2 : index
    %c0_81 = arith.constant 0 : index
    %215 = vector.load %arg7[%c1_79, %c2_80, %c0_81] : memref<2x6x32xf32, #tpu.memory_space<vmem>>, vector<1x1x32xf32>
    %216 = vector.shape_cast %215 : vector<1x1x32xf32> to vector<1x32xf32>
    %c1_82 = arith.constant 1 : index
    %c3_83 = arith.constant 3 : index
    %c0_84 = arith.constant 0 : index
    %217 = vector.load %arg7[%c1_82, %c3_83, %c0_84] : memref<2x6x32xf32, #tpu.memory_space<vmem>>, vector<1x1x32xf32>
    %218 = vector.shape_cast %217 : vector<1x1x32xf32> to vector<1x32xf32>
    %c1_85 = arith.constant 1 : index
    %c4_86 = arith.constant 4 : index
    %c0_87 = arith.constant 0 : index
    %219 = vector.load %arg7[%c1_85, %c4_86, %c0_87] : memref<2x6x32xf32, #tpu.memory_space<vmem>>, vector<1x1x32xf32>
    %220 = vector.shape_cast %219 : vector<1x1x32xf32> to vector<1x32xf32>
    %c1_88 = arith.constant 1 : index
    %c5_89 = arith.constant 5 : index
    %c0_90 = arith.constant 0 : index
    %221 = vector.load %arg7[%c1_88, %c5_89, %c0_90] : memref<2x6x32xf32, #tpu.memory_space<vmem>>, vector<1x1x32xf32>
    %222 = vector.shape_cast %221 : vector<1x1x32xf32> to vector<1x32xf32>
    %cst_91 = arith.constant dense<0.000000e+00> : vector<16xf32>
    %223 = vector.multi_reduction <add>, %210, %cst_91 [1] : vector<16x32xf32> to vector<16xf32>
    %224 = vector.shape_cast %223 : vector<16xf32> to vector<16x1xf32>
    %cst_92 = arith.constant 3.200000e+01 : f32
    %225 = vector.broadcast %cst_92 : f32 to vector<16x1xf32>
    %226 = arith.divf %224, %225 : vector<16x1xf32>
    %227 = vector.broadcast %226 : vector<16x1xf32> to vector<16x32xf32>
    %228 = arith.subf %210, %227 : vector<16x32xf32>
    %229 = arith.mulf %228, %228 : vector<16x32xf32>
    %cst_93 = arith.constant dense<0.000000e+00> : vector<16xf32>
    %230 = vector.multi_reduction <add>, %229, %cst_93 [1] : vector<16x32xf32> to vector<16xf32>
    %231 = vector.shape_cast %230 : vector<16xf32> to vector<16x1xf32>
    %cst_94 = arith.constant 3.200000e+01 : f32
    %232 = vector.broadcast %cst_94 : f32 to vector<16x1xf32>
    %233 = arith.divf %231, %232 : vector<16x1xf32>
    %234 = vector.broadcast %226 : vector<16x1xf32> to vector<16x32xf32>
    %235 = arith.subf %210, %234 : vector<16x32xf32>
    %cst_95 = arith.constant 9.99999974E-6 : f32
    %236 = vector.broadcast %cst_95 : f32 to vector<16x1xf32>
    %237 = arith.addf %233, %236 : vector<16x1xf32>
    %238 = math.rsqrt %237 : vector<16x1xf32>
    %239 = vector.broadcast %238 : vector<16x1xf32> to vector<16x32xf32>
    %240 = arith.mulf %235, %239 : vector<16x32xf32>
    %241 = vector.broadcast %212 : vector<1x32xf32> to vector<16x32xf32>
    %242 = arith.mulf %240, %241 : vector<16x32xf32>
    %243 = vector.broadcast %214 : vector<1x32xf32> to vector<16x32xf32>
    %244 = arith.addf %242, %243 : vector<16x32xf32>
    %245 = arith.truncf %244 : vector<16x32xf32> to vector<16x32xbf16>
    %c1_96 = arith.constant 1 : index
    %c0_97 = arith.constant 0 : index
    %c0_98 = arith.constant 0 : index
    %246 = vector.load %arg4[%c1_96, %c0_97, %c0_98] : memref<2x32x96xbf16, #tpu.memory_space<vmem>>, vector<1x32x96xbf16>
    %247 = vector.shape_cast %246 : vector<1x32x96xbf16> to vector<32x96xbf16>
    %cst_99 = arith.constant dense<0.000000e+00> : vector<16x96xf32>
    %248 = tpu.matmul %245, %247, %cst_99 {dimension_numbers = #tpu.dot_dimension_numbers<[1], [0], [0], [1], [0, 0, 1, 1], [], []>} : vector<16x32xbf16>, vector<32x96xbf16>, vector<16x96xf32> -> vector<16x96xf32>
    %c1_100 = arith.constant 1 : index
    %c0_101 = arith.constant 0 : index
    %c0_102 = arith.constant 0 : index
    %249 = vector.load %arg5[%c1_100, %c0_101, %c0_102] : memref<2x1x96xf32, #tpu.memory_space<vmem>>, vector<1x1x96xf32>
    %250 = vector.shape_cast %249 : vector<1x1x96xf32> to vector<1x96xf32>
    %251 = vector.broadcast %250 : vector<1x96xf32> to vector<16x96xf32>
    %252 = arith.addf %248, %251 : vector<16x96xf32>
    %253 = vector.extract_strided_slice %252 {offsets = [0, 0], sizes = [16, 8], strides = [1, 1]} : vector<16x96xf32> to vector<16x8xf32>
    %254 = arith.truncf %253 : vector<16x8xf32> to vector<16x8xbf16>
    %255 = vector.extract_strided_slice %252 {offsets = [0, 32], sizes = [16, 8], strides = [1, 1]} : vector<16x96xf32> to vector<16x8xf32>
    %256 = arith.truncf %255 : vector<16x8xf32> to vector<16x8xbf16>
    %257 = vector.extract_strided_slice %252 {offsets = [0, 64], sizes = [16, 8], strides = [1, 1]} : vector<16x96xf32> to vector<16x8xf32>
    %258 = arith.truncf %257 : vector<16x8xf32> to vector<16x8xbf16>
    %cst_103 = arith.constant dense<0.000000e+00> : vector<16x16xf32>
    %259 = tpu.matmul %254, %256, %cst_103 {dimension_numbers = #tpu.dot_dimension_numbers<[1], [1], [0], [0], [0, 0, 1, 0], [], []>} : vector<16x8xbf16>, vector<16x8xbf16>, vector<16x16xf32> -> vector<16x16xf32>
    %260 = arith.addf %259, %35 : vector<16x16xf32>
    %cst_104 = arith.constant dense<0xFF800000> : vector<16xf32>
    %261 = vector.multi_reduction <maximumf>, %260, %cst_104 [1] : vector<16x16xf32> to vector<16xf32>
    %262 = vector.shape_cast %261 : vector<16xf32> to vector<16x1xf32>
    %263 = vector.broadcast %262 : vector<16x1xf32> to vector<16x16xf32>
    %264 = arith.subf %260, %263 : vector<16x16xf32>
    %265 = math.exp %264 : vector<16x16xf32>
    %cst_105 = arith.constant dense<0.000000e+00> : vector<16xf32>
    %266 = vector.multi_reduction <add>, %265, %cst_105 [1] : vector<16x16xf32> to vector<16xf32>
    %267 = vector.shape_cast %266 : vector<16xf32> to vector<16x1xf32>
    %268 = tpu.reciprocal %267 {approx = true} : vector<16x1xf32> -> vector<16x1xf32>
    %269 = vector.broadcast %268 : vector<16x1xf32> to vector<16x16xf32>
    %270 = arith.mulf %265, %269 : vector<16x16xf32>
    %271 = arith.truncf %270 : vector<16x16xf32> to vector<16x16xbf16>
    %cst_106 = arith.constant dense<0.000000e+00> : vector<16x8xf32>
    %272 = tpu.matmul %271, %258, %cst_106 {dimension_numbers = #tpu.dot_dimension_numbers<[1], [0], [0], [1], [0, 0, 1, 1], [], []>} : vector<16x16xbf16>, vector<16x8xbf16>, vector<16x8xf32> -> vector<16x8xf32>
    %273 = vector.extract_strided_slice %252 {offsets = [0, 8], sizes = [16, 8], strides = [1, 1]} : vector<16x96xf32> to vector<16x8xf32>
    %274 = arith.truncf %273 : vector<16x8xf32> to vector<16x8xbf16>
    %275 = vector.extract_strided_slice %252 {offsets = [0, 40], sizes = [16, 8], strides = [1, 1]} : vector<16x96xf32> to vector<16x8xf32>
    %276 = arith.truncf %275 : vector<16x8xf32> to vector<16x8xbf16>
    %277 = vector.extract_strided_slice %252 {offsets = [0, 72], sizes = [16, 8], strides = [1, 1]} : vector<16x96xf32> to vector<16x8xf32>
    %278 = arith.truncf %277 : vector<16x8xf32> to vector<16x8xbf16>
    %cst_107 = arith.constant dense<0.000000e+00> : vector<16x16xf32>
    %279 = tpu.matmul %274, %276, %cst_107 {dimension_numbers = #tpu.dot_dimension_numbers<[1], [1], [0], [0], [0, 0, 1, 0], [], []>} : vector<16x8xbf16>, vector<16x8xbf16>, vector<16x16xf32> -> vector<16x16xf32>
    %280 = arith.addf %279, %35 : vector<16x16xf32>
    %cst_108 = arith.constant dense<0xFF800000> : vector<16xf32>
    %281 = vector.multi_reduction <maximumf>, %280, %cst_108 [1] : vector<16x16xf32> to vector<16xf32>
    %282 = vector.shape_cast %281 : vector<16xf32> to vector<16x1xf32>
    %283 = vector.broadcast %282 : vector<16x1xf32> to vector<16x16xf32>
    %284 = arith.subf %280, %283 : vector<16x16xf32>
    %285 = math.exp %284 : vector<16x16xf32>
    %cst_109 = arith.constant dense<0.000000e+00> : vector<16xf32>
    %286 = vector.multi_reduction <add>, %285, %cst_109 [1] : vector<16x16xf32> to vector<16xf32>
    %287 = vector.shape_cast %286 : vector<16xf32> to vector<16x1xf32>
    %288 = tpu.reciprocal %287 {approx = true} : vector<16x1xf32> -> vector<16x1xf32>
    %289 = vector.broadcast %288 : vector<16x1xf32> to vector<16x16xf32>
    %290 = arith.mulf %285, %289 : vector<16x16xf32>
    %291 = arith.truncf %290 : vector<16x16xf32> to vector<16x16xbf16>
    %cst_110 = arith.constant dense<0.000000e+00> : vector<16x8xf32>
    %292 = tpu.matmul %291, %278, %cst_110 {dimension_numbers = #tpu.dot_dimension_numbers<[1], [0], [0], [1], [0, 0, 1, 1], [], []>} : vector<16x16xbf16>, vector<16x8xbf16>, vector<16x8xf32> -> vector<16x8xf32>
    %293 = vector.extract_strided_slice %252 {offsets = [0, 16], sizes = [16, 8], strides = [1, 1]} : vector<16x96xf32> to vector<16x8xf32>
    %294 = arith.truncf %293 : vector<16x8xf32> to vector<16x8xbf16>
    %295 = vector.extract_strided_slice %252 {offsets = [0, 48], sizes = [16, 8], strides = [1, 1]} : vector<16x96xf32> to vector<16x8xf32>
    %296 = arith.truncf %295 : vector<16x8xf32> to vector<16x8xbf16>
    %297 = vector.extract_strided_slice %252 {offsets = [0, 80], sizes = [16, 8], strides = [1, 1]} : vector<16x96xf32> to vector<16x8xf32>
    %298 = arith.truncf %297 : vector<16x8xf32> to vector<16x8xbf16>
    %cst_111 = arith.constant dense<0.000000e+00> : vector<16x16xf32>
    %299 = tpu.matmul %294, %296, %cst_111 {dimension_numbers = #tpu.dot_dimension_numbers<[1], [1], [0], [0], [0, 0, 1, 0], [], []>} : vector<16x8xbf16>, vector<16x8xbf16>, vector<16x16xf32> -> vector<16x16xf32>
    %300 = arith.addf %299, %35 : vector<16x16xf32>
    %cst_112 = arith.constant dense<0xFF800000> : vector<16xf32>
    %301 = vector.multi_reduction <maximumf>, %300, %cst_112 [1] : vector<16x16xf32> to vector<16xf32>
    %302 = vector.shape_cast %301 : vector<16xf32> to vector<16x1xf32>
    %303 = vector.broadcast %302 : vector<16x1xf32> to vector<16x16xf32>
    %304 = arith.subf %300, %303 : vector<16x16xf32>
    %305 = math.exp %304 : vector<16x16xf32>
    %cst_113 = arith.constant dense<0.000000e+00> : vector<16xf32>
    %306 = vector.multi_reduction <add>, %305, %cst_113 [1] : vector<16x16xf32> to vector<16xf32>
    %307 = vector.shape_cast %306 : vector<16xf32> to vector<16x1xf32>
    %308 = tpu.reciprocal %307 {approx = true} : vector<16x1xf32> -> vector<16x1xf32>
    %309 = vector.broadcast %308 : vector<16x1xf32> to vector<16x16xf32>
    %310 = arith.mulf %305, %309 : vector<16x16xf32>
    %311 = arith.truncf %310 : vector<16x16xf32> to vector<16x16xbf16>
    %cst_114 = arith.constant dense<0.000000e+00> : vector<16x8xf32>
    %312 = tpu.matmul %311, %298, %cst_114 {dimension_numbers = #tpu.dot_dimension_numbers<[1], [0], [0], [1], [0, 0, 1, 1], [], []>} : vector<16x16xbf16>, vector<16x8xbf16>, vector<16x8xf32> -> vector<16x8xf32>
    %313 = vector.extract_strided_slice %252 {offsets = [0, 24], sizes = [16, 8], strides = [1, 1]} : vector<16x96xf32> to vector<16x8xf32>
    %314 = arith.truncf %313 : vector<16x8xf32> to vector<16x8xbf16>
    %315 = vector.extract_strided_slice %252 {offsets = [0, 56], sizes = [16, 8], strides = [1, 1]} : vector<16x96xf32> to vector<16x8xf32>
    %316 = arith.truncf %315 : vector<16x8xf32> to vector<16x8xbf16>
    %317 = vector.extract_strided_slice %252 {offsets = [0, 88], sizes = [16, 8], strides = [1, 1]} : vector<16x96xf32> to vector<16x8xf32>
    %318 = arith.truncf %317 : vector<16x8xf32> to vector<16x8xbf16>
    %cst_115 = arith.constant dense<0.000000e+00> : vector<16x16xf32>
    %319 = tpu.matmul %314, %316, %cst_115 {dimension_numbers = #tpu.dot_dimension_numbers<[1], [1], [0], [0], [0, 0, 1, 0], [], []>} : vector<16x8xbf16>, vector<16x8xbf16>, vector<16x16xf32> -> vector<16x16xf32>
    %320 = arith.addf %319, %35 : vector<16x16xf32>
    %cst_116 = arith.constant dense<0xFF800000> : vector<16xf32>
    %321 = vector.multi_reduction <maximumf>, %320, %cst_116 [1] : vector<16x16xf32> to vector<16xf32>
    %322 = vector.shape_cast %321 : vector<16xf32> to vector<16x1xf32>
    %323 = vector.broadcast %322 : vector<16x1xf32> to vector<16x16xf32>
    %324 = arith.subf %320, %323 : vector<16x16xf32>
    %325 = math.exp %324 : vector<16x16xf32>
    %cst_117 = arith.constant dense<0.000000e+00> : vector<16xf32>
    %326 = vector.multi_reduction <add>, %325, %cst_117 [1] : vector<16x16xf32> to vector<16xf32>
    %327 = vector.shape_cast %326 : vector<16xf32> to vector<16x1xf32>
    %328 = tpu.reciprocal %327 {approx = true} : vector<16x1xf32> -> vector<16x1xf32>
    %329 = vector.broadcast %328 : vector<16x1xf32> to vector<16x16xf32>
    %330 = arith.mulf %325, %329 : vector<16x16xf32>
    %331 = arith.truncf %330 : vector<16x16xf32> to vector<16x16xbf16>
    %cst_118 = arith.constant dense<0.000000e+00> : vector<16x8xf32>
    %332 = tpu.matmul %331, %318, %cst_118 {dimension_numbers = #tpu.dot_dimension_numbers<[1], [0], [0], [1], [0, 0, 1, 1], [], []>} : vector<16x16xbf16>, vector<16x8xbf16>, vector<16x8xf32> -> vector<16x8xf32>
    %333 = tpu.concatenate %272, %292, %312, %332 in 1 : vector<16x8xf32>, vector<16x8xf32>, vector<16x8xf32>, vector<16x8xf32> -> vector<16x32xf32>
    %334 = arith.truncf %333 : vector<16x32xf32> to vector<16x32xbf16>
    %c1_119 = arith.constant 1 : index
    %c0_120 = arith.constant 0 : index
    %c0_121 = arith.constant 0 : index
    %335 = vector.load %arg6[%c1_119, %c0_120, %c0_121] : memref<2x32x32xbf16, #tpu.memory_space<vmem>>, vector<1x32x32xbf16>
    %336 = vector.shape_cast %335 : vector<1x32x32xbf16> to vector<32x32xbf16>
    %cst_122 = arith.constant dense<0.000000e+00> : vector<16x32xf32>
    %337 = tpu.matmul %334, %336, %cst_122 {dimension_numbers = #tpu.dot_dimension_numbers<[1], [0], [0], [1], [0, 0, 1, 1], [], []>} : vector<16x32xbf16>, vector<32x32xbf16>, vector<16x32xf32> -> vector<16x32xf32>
    %338 = arith.addf %210, %337 : vector<16x32xf32>
    %339 = vector.broadcast %220 : vector<1x32xf32> to vector<16x32xf32>
    %340 = arith.addf %338, %339 : vector<16x32xf32>
    %cst_123 = arith.constant dense<0.000000e+00> : vector<16xf32>
    %341 = vector.multi_reduction <add>, %340, %cst_123 [1] : vector<16x32xf32> to vector<16xf32>
    %342 = vector.shape_cast %341 : vector<16xf32> to vector<16x1xf32>
    %cst_124 = arith.constant 3.200000e+01 : f32
    %343 = vector.broadcast %cst_124 : f32 to vector<16x1xf32>
    %344 = arith.divf %342, %343 : vector<16x1xf32>
    %345 = vector.broadcast %344 : vector<16x1xf32> to vector<16x32xf32>
    %346 = arith.subf %340, %345 : vector<16x32xf32>
    %347 = arith.mulf %346, %346 : vector<16x32xf32>
    %cst_125 = arith.constant dense<0.000000e+00> : vector<16xf32>
    %348 = vector.multi_reduction <add>, %347, %cst_125 [1] : vector<16x32xf32> to vector<16xf32>
    %349 = vector.shape_cast %348 : vector<16xf32> to vector<16x1xf32>
    %cst_126 = arith.constant 3.200000e+01 : f32
    %350 = vector.broadcast %cst_126 : f32 to vector<16x1xf32>
    %351 = arith.divf %349, %350 : vector<16x1xf32>
    %352 = vector.broadcast %344 : vector<16x1xf32> to vector<16x32xf32>
    %353 = arith.subf %340, %352 : vector<16x32xf32>
    %cst_127 = arith.constant 9.99999974E-6 : f32
    %354 = vector.broadcast %cst_127 : f32 to vector<16x1xf32>
    %355 = arith.addf %351, %354 : vector<16x1xf32>
    %356 = math.rsqrt %355 : vector<16x1xf32>
    %357 = vector.broadcast %356 : vector<16x1xf32> to vector<16x32xf32>
    %358 = arith.mulf %353, %357 : vector<16x32xf32>
    %359 = vector.broadcast %216 : vector<1x32xf32> to vector<16x32xf32>
    %360 = arith.mulf %358, %359 : vector<16x32xf32>
    %361 = vector.broadcast %218 : vector<1x32xf32> to vector<16x32xf32>
    %362 = arith.addf %360, %361 : vector<16x32xf32>
    %363 = arith.truncf %362 : vector<16x32xf32> to vector<16x32xbf16>
    %c1_128 = arith.constant 1 : index
    %c0_129 = arith.constant 0 : index
    %c0_130 = arith.constant 0 : index
    %364 = vector.load %arg8[%c1_128, %c0_129, %c0_130] : memref<2x32x64xbf16, #tpu.memory_space<vmem>>, vector<1x32x64xbf16>
    %365 = vector.shape_cast %364 : vector<1x32x64xbf16> to vector<32x64xbf16>
    %cst_131 = arith.constant dense<0.000000e+00> : vector<16x64xf32>
    %366 = tpu.matmul %363, %365, %cst_131 {dimension_numbers = #tpu.dot_dimension_numbers<[1], [0], [0], [1], [0, 0, 1, 1], [], []>} : vector<16x32xbf16>, vector<32x64xbf16>, vector<16x64xf32> -> vector<16x64xf32>
    %c1_132 = arith.constant 1 : index
    %c0_133 = arith.constant 0 : index
    %c0_134 = arith.constant 0 : index
    %367 = vector.load %arg9[%c1_132, %c0_133, %c0_134] : memref<2x1x64xf32, #tpu.memory_space<vmem>>, vector<1x1x64xf32>
    %368 = vector.shape_cast %367 : vector<1x1x64xf32> to vector<1x64xf32>
    %369 = vector.broadcast %368 : vector<1x64xf32> to vector<16x64xf32>
    %370 = arith.addf %366, %369 : vector<16x64xf32>
    %cst_135 = arith.constant 1.702000e+00 : f32
    %371 = vector.broadcast %cst_135 : f32 to vector<16x64xf32>
    %372 = arith.mulf %371, %370 : vector<16x64xf32>
    %373 = arith.negf %372 : vector<16x64xf32>
    %374 = math.exp %373 : vector<16x64xf32>
    %cst_136 = arith.constant 1.000000e+00 : f32
    %375 = vector.broadcast %cst_136 : f32 to vector<16x64xf32>
    %376 = arith.addf %375, %374 : vector<16x64xf32>
    %377 = arith.divf %375, %376 : vector<16x64xf32>
    %378 = arith.mulf %370, %377 : vector<16x64xf32>
    %379 = arith.truncf %378 : vector<16x64xf32> to vector<16x64xbf16>
    %c1_137 = arith.constant 1 : index
    %c0_138 = arith.constant 0 : index
    %c0_139 = arith.constant 0 : index
    %380 = vector.load %arg10[%c1_137, %c0_138, %c0_139] : memref<2x64x32xbf16, #tpu.memory_space<vmem>>, vector<1x64x32xbf16>
    %381 = vector.shape_cast %380 : vector<1x64x32xbf16> to vector<64x32xbf16>
    %cst_140 = arith.constant dense<0.000000e+00> : vector<16x32xf32>
    %382 = tpu.matmul %379, %381, %cst_140 {dimension_numbers = #tpu.dot_dimension_numbers<[1], [0], [0], [1], [0, 0, 1, 1], [], []>} : vector<16x64xbf16>, vector<64x32xbf16>, vector<16x32xf32> -> vector<16x32xf32>
    %383 = arith.addf %340, %382 : vector<16x32xf32>
    %384 = vector.broadcast %222 : vector<1x32xf32> to vector<16x32xf32>
    %385 = arith.addf %383, %384 : vector<16x32xf32>
    %c0_141 = arith.constant 0 : index
    %c0_142 = arith.constant 0 : index
    %386 = vector.load %arg14[%c0_141, %c0_142] : memref<16x32xf32, #tpu.memory_space<vmem>>, vector<16x32xf32>
    tpu.vector_store %arg14[%c0_141, %c0_142], %385 {strides = array<i32>} : memref<16x32xf32, #tpu.memory_space<vmem>>, vector<16x32xf32>,
    %c0_143 = arith.constant 0 : index
    %387 = memref.load %arg1[%c0_143] : memref<2xi32, #tpu.memory_space<smem>>
    %c0_i32_144 = arith.constant 0 : i32
    %388 = arith.addi %c0_i32_144, %387 : i32
    %389 = arith.index_cast %388 : i32 to index
    %c0_145 = arith.constant 0 : index
    %390 = vector.load %arg14[%389, %c0_145] : memref<16x32xf32, #tpu.memory_space<vmem>>, vector<1x32xf32>
    %c1_146 = arith.constant 1 : index
    %391 = memref.load %arg1[%c1_146] : memref<2xi32, #tpu.memory_space<smem>>
    %c8_i32_147 = arith.constant 8 : i32
    %392 = arith.addi %c8_i32_147, %391 : i32
    %393 = arith.index_cast %392 : i32 to index
    %c0_148 = arith.constant 0 : index
    %394 = vector.load %arg14[%393, %c0_148] : memref<16x32xf32, #tpu.memory_space<vmem>>, vector<1x32xf32>
    %395 = tpu.concatenate %390, %394 in 0 : vector<1x32xf32>, vector<1x32xf32> -> vector<2x32xf32>
    %c0_149 = arith.constant 0 : index
    %c0_150 = arith.constant 0 : index
    %396 = vector.load %arg11[%c0_149, %c0_150] : memref<2x32xf32, #tpu.memory_space<vmem>>, vector<1x32xf32>
    %c1_151 = arith.constant 1 : index
    %c0_152 = arith.constant 0 : index
    %397 = vector.load %arg11[%c1_151, %c0_152] : memref<2x32xf32, #tpu.memory_space<vmem>>, vector<1x32xf32>
    %cst_153 = arith.constant dense<0.000000e+00> : vector<2xf32>
    %398 = vector.multi_reduction <add>, %395, %cst_153 [1] : vector<2x32xf32> to vector<2xf32>
    %399 = vector.shape_cast %398 : vector<2xf32> to vector<2x1xf32>
    %cst_154 = arith.constant 3.200000e+01 : f32
    %400 = vector.broadcast %cst_154 : f32 to vector<2x1xf32>
    %401 = arith.divf %399, %400 : vector<2x1xf32>
    %402 = vector.broadcast %401 : vector<2x1xf32> to vector<2x32xf32>
    %403 = arith.subf %395, %402 : vector<2x32xf32>
    %404 = arith.mulf %403, %403 : vector<2x32xf32>
    %cst_155 = arith.constant dense<0.000000e+00> : vector<2xf32>
    %405 = vector.multi_reduction <add>, %404, %cst_155 [1] : vector<2x32xf32> to vector<2xf32>
    %406 = vector.shape_cast %405 : vector<2xf32> to vector<2x1xf32>
    %cst_156 = arith.constant 3.200000e+01 : f32
    %407 = vector.broadcast %cst_156 : f32 to vector<2x1xf32>
    %408 = arith.divf %406, %407 : vector<2x1xf32>
    %409 = vector.broadcast %401 : vector<2x1xf32> to vector<2x32xf32>
    %410 = arith.subf %395, %409 : vector<2x32xf32>
    %cst_157 = arith.constant 9.99999974E-6 : f32
    %411 = vector.broadcast %cst_157 : f32 to vector<2x1xf32>
    %412 = arith.addf %408, %411 : vector<2x1xf32>
    %413 = math.rsqrt %412 : vector<2x1xf32>
    %414 = vector.broadcast %413 : vector<2x1xf32> to vector<2x32xf32>
    %415 = arith.mulf %410, %414 : vector<2x32xf32>
    %416 = vector.broadcast %396 : vector<1x32xf32> to vector<2x32xf32>
    %417 = arith.mulf %415, %416 : vector<2x32xf32>
    %418 = vector.broadcast %397 : vector<1x32xf32> to vector<2x32xf32>
    %419 = arith.addf %417, %418 : vector<2x32xf32>
    %420 = arith.truncf %419 : vector<2x32xf32> to vector<2x32xbf16>
    %c0_158 = arith.constant 0 : index
    %c0_159 = arith.constant 0 : index
    %421 = vector.load %arg12[%c0_158, %c0_159] : memref<32x16xbf16, #tpu.memory_space<vmem>>, vector<32x16xbf16>
    %cst_160 = arith.constant dense<0.000000e+00> : vector<2x16xf32>
    %422 = tpu.matmul %420, %421, %cst_160 {dimension_numbers = #tpu.dot_dimension_numbers<[1], [0], [0], [1], [0, 0, 1, 1], [], []>} : vector<2x32xbf16>, vector<32x16xbf16>, vector<2x16xf32> -> vector<2x16xf32>
    %c0_161 = arith.constant 0 : index
    %c0_162 = arith.constant 0 : index
    %423 = vector.load %arg13[%c0_161, %c0_162] : memref<2x16xf32, #tpu.memory_space<vmem>>, vector<2x16xf32>
    tpu.vector_store %arg13[%c0_161, %c0_162], %422 {strides = array<i32>} : memref<2x16xf32, #tpu.memory_space<vmem>>, vector<2x16xf32>,
    return
  }
  func.func @transform_0(%arg0: i32, %arg1: memref<2xi32, #tpu.memory_space<smem>>) -> (i32, i32) {
    %c0_i32 = arith.constant 0 : i32
    %c0_i32_0 = arith.constant 0 : i32
    %c0_i32_1 = arith.constant 0 : i32
    return %c0_i32, %c0_i32_0 : i32, i32
  }
  func.func @transform_1(%arg0: i32, %arg1: memref<2xi32, #tpu.memory_space<smem>>) -> (i32, i32) {
    %c0_i32 = arith.constant 0 : i32
    %c0_i32_0 = arith.constant 0 : i32
    %c0_i32_1 = arith.constant 0 : i32
    return %c0_i32, %c0_i32_0 : i32, i32
  }
  func.func @transform_2(%arg0: i32, %arg1: memref<2xi32, #tpu.memory_space<smem>>) -> (i32, i32, i32) {
    %c0_i32 = arith.constant 0 : i32
    %c0_i32_0 = arith.constant 0 : i32
    %c0_i32_1 = arith.constant 0 : i32
    %c0_i32_2 = arith.constant 0 : i32
    return %c0_i32, %c0_i32_0, %c0_i32_1 : i32, i32, i32
  }
  func.func @transform_3(%arg0: i32, %arg1: memref<2xi32, #tpu.memory_space<smem>>) -> (i32, i32, i32) {
    %c0_i32 = arith.constant 0 : i32
    %c0_i32_0 = arith.constant 0 : i32
    %c0_i32_1 = arith.constant 0 : i32
    %c0_i32_2 = arith.constant 0 : i32
    return %c0_i32, %c0_i32_0, %c0_i32_1 : i32, i32, i32
  }
  func.func @transform_4(%arg0: i32, %arg1: memref<2xi32, #tpu.memory_space<smem>>) -> (i32, i32, i32) {
    %c0_i32 = arith.constant 0 : i32
    %c0_i32_0 = arith.constant 0 : i32
    %c0_i32_1 = arith.constant 0 : i32
    %c0_i32_2 = arith.constant 0 : i32
    return %c0_i32, %c0_i32_0, %c0_i32_1 : i32, i32, i32
  }
  func.func @transform_5(%arg0: i32, %arg1: memref<2xi32, #tpu.memory_space<smem>>) -> (i32, i32, i32) {
    %c0_i32 = arith.constant 0 : i32
    %c0_i32_0 = arith.constant 0 : i32
    %c0_i32_1 = arith.constant 0 : i32
    %c0_i32_2 = arith.constant 0 : i32
    return %c0_i32, %c0_i32_0, %c0_i32_1 : i32, i32, i32
  }
  func.func @transform_6(%arg0: i32, %arg1: memref<2xi32, #tpu.memory_space<smem>>) -> (i32, i32, i32) {
    %c0_i32 = arith.constant 0 : i32
    %c0_i32_0 = arith.constant 0 : i32
    %c0_i32_1 = arith.constant 0 : i32
    %c0_i32_2 = arith.constant 0 : i32
    return %c0_i32, %c0_i32_0, %c0_i32_1 : i32, i32, i32
  }
  func.func @transform_7(%arg0: i32, %arg1: memref<2xi32, #tpu.memory_space<smem>>) -> (i32, i32, i32) {
    %c0_i32 = arith.constant 0 : i32
    %c0_i32_0 = arith.constant 0 : i32
    %c0_i32_1 = arith.constant 0 : i32
    %c0_i32_2 = arith.constant 0 : i32
    return %c0_i32, %c0_i32_0, %c0_i32_1 : i32, i32, i32
  }
  func.func @transform_8(%arg0: i32, %arg1: memref<2xi32, #tpu.memory_space<smem>>) -> (i32, i32, i32) {
    %c0_i32 = arith.constant 0 : i32
    %c0_i32_0 = arith.constant 0 : i32
    %c0_i32_1 = arith.constant 0 : i32
    %c0_i32_2 = arith.constant 0 : i32
    return %c0_i32, %c0_i32_0, %c0_i32_1 : i32, i32, i32
  }
  func.func @transform_9(%arg0: i32, %arg1: memref<2xi32, #tpu.memory_space<smem>>) -> (i32, i32) {
    %c0_i32 = arith.constant 0 : i32
    %c0_i32_0 = arith.constant 0 : i32
    %c0_i32_1 = arith.constant 0 : i32
    return %c0_i32, %c0_i32_0 : i32, i32
  }
  func.func @transform_10(%arg0: i32, %arg1: memref<2xi32, #tpu.memory_space<smem>>) -> (i32, i32) {
    %c0_i32 = arith.constant 0 : i32
    %c0_i32_0 = arith.constant 0 : i32
    %c0_i32_1 = arith.constant 0 : i32
    return %c0_i32, %c0_i32_0 : i32, i32
  }
  func.func @transform_11(%arg0: i32, %arg1: memref<2xi32, #tpu.memory_space<smem>>) -> (i32, i32) {
    %c0_i32 = arith.constant 0 : i32
    %c0_i32_0 = arith.constant 0 : i32
    %c0_i32_1 = arith.constant 0 : i32
    return %c0_i32, %c0_i32_0 : i32, i32
  }
}

</mosaic_0001>

<llo_original>
// kernel: clip_get_text_features.1
$region0: #{clip_get_text_features.1}
  #allocation0 [shape = 'u32[]', space=smem, size = 0x4, offset = 0x4, fixed_abs, tag = 'smem constant byte address 0x4 - core index']
  #allocation1 [shape = 'u32[144,128]{1,0:T(1,128)}', space=vmem, size = 0x12000, scoped, tag = 'internal scratch']
  #allocation2 [shape = 'f32[16,32]{1,0:T(8,128)}', space=vmem, size = 0x2000, scoped, tag = 'scratch operand']
  #allocation3 [shape = 's32[1]{0}', space=sflag, size = 0x4, scoped, tag = 'scoped memory for clip_get_text_features.1']
  #allocation4 [shape = 'u8[512]{0}', space=smem, size = 0x200, scoped, tag = 'prefetched SMEM operand 0']
  %s0 = inlined_call_operand.vmem [shape: s32[2], index: 0, kind: input, shape index: {}]
  %s1 = inlined_call_operand.vmem [shape: f32[16,32], index: 1, kind: input, shape index: {}]
  %s2 = inlined_call_operand.vmem [shape: s32[1,16], index: 2, kind: input, shape index: {}]
  %s3 = inlined_call_operand.vmem [shape: bf16[2,32,96], index: 3, kind: input, shape index: {}]
  %s4 = inlined_call_operand.vmem [shape: f32[2,1,96], index: 4, kind: input, shape index: {}]
  %s5 = inlined_call_operand.vmem [shape: bf16[2,32,32], index: 5, kind: input, shape index: {}]
  %s6 = inlined_call_operand.vmem [shape: f32[2,6,32], index: 6, kind: input, shape index: {}]
  %s7 = inlined_call_operand.vmem [shape: bf16[2,32,64], index: 7, kind: input, shape index: {}]
  %s8 = inlined_call_operand.vmem [shape: f32[2,1,64], index: 8, kind: input, shape index: {}]
  %s9 = inlined_call_operand.vmem [shape: bf16[2,64,32], index: 9, kind: input, shape index: {}]
  %s10 = inlined_call_operand.vmem [shape: f32[2,32], index: 10, kind: input, shape index: {}]
  %s11 = inlined_call_operand.vmem [shape: bf16[32,16], index: 11, kind: input, shape index: {}]
  %s12 = inlined_call_operand.hbm [shape: f32[2,16], index: 12, kind: output, shape index: {}]
  %s13 = sld [smem:[#allocation0]]
  $region54: #{clip_get_text_features.1} parent=0
    _
  %s15 = ssub.s32 1, %s13
  %s16 = scalar_select 0, %s15, %s13
  %s17 = sshll.u32 %s0, 4
  %s18 = int_to_ptr.vmem [resolvable:$true] %s17
  %20 = dma.vmem_to_smem %s18, 16, [#allocation4], [#allocation3]
  %21 = dma.done [#allocation3], 16
  %22 = sfence
  $region1: #{clip_get_text_features.1} parent=0
    #allocation5 [shape = 'u8[1024]{0}', space=vmem, size = 0x400, scoped, tag = 'output window, operand 0, single buffered']
    #allocation6 [shape = 's32[1]{0}', space=sflag, size = 0x4, scoped, tag = 'scoped memory for clip_get_text_features.1']
    %23 = vsyncpa [#allocation6], 0
    // Predicated region
    $region2: #{clip_get_text_features.1} parent=1 // pred_check
      _
    $region3: #{clip_get_text_features.1} parent=1 // pred_check_branch
      %25 = sbr.rel (0) target = $region5
    $region4: #{clip_get_text_features.1} parent=1 // pred_region
      _
    $region5: #{clip_get_text_features.1} parent=1 // pred_fallthru
      _
    // Predicated region
    $region6: #{clip_get_text_features.1} parent=1 // pred_check
      _
    $region7: #{clip_get_text_features.1} parent=1 // pred_check_branch
      %27 = sbr.rel (0) target = $region9
    $region8: #{clip_get_text_features.1} parent=1 // pred_region
      _
    $region9: #{clip_get_text_features.1} parent=1 // pred_fallthru
      _
    // Predicated region
    $region10: #{clip_get_text_features.1} parent=1 // pred_check
      _
    $region11: #{clip_get_text_features.1} parent=1 // pred_check_branch
      %29 = sbr.rel (0) target = $region13
    $region12: #{clip_get_text_features.1} parent=1 // pred_region
      _
    $region13: #{clip_get_text_features.1} parent=1 // pred_fallthru
      _
    // Predicated region
    $region14: #{clip_get_text_features.1} parent=1 // pred_check
      _
    $region15: #{clip_get_text_features.1} parent=1 // pred_check_branch
      %31 = sbr.rel (0) target = $region17
    $region16: #{clip_get_text_features.1} parent=1 // pred_region
      _
    $region17: #{clip_get_text_features.1} parent=1 // pred_fallthru
      _
    // Predicated region
    $region18: #{clip_get_text_features.1} parent=1 // pred_check
      _
    $region19: #{clip_get_text_features.1} parent=1 // pred_check_branch
      %33 = sbr.rel (0) target = $region21
    $region20: #{clip_get_text_features.1} parent=1 // pred_region
      _
    $region21: #{clip_get_text_features.1} parent=1 // pred_fallthru
      _
    // Predicated region
    $region22: #{clip_get_text_features.1} parent=1 // pred_check
      _
    $region23: #{clip_get_text_features.1} parent=1 // pred_check_branch
      %35 = sbr.rel (0) target = $region25
    $region24: #{clip_get_text_features.1} parent=1 // pred_region
      _
    $region25: #{clip_get_text_features.1} parent=1 // pred_fallthru
      _
    // Predicated region
    $region26: #{clip_get_text_features.1} parent=1 // pred_check
      _
    $region27: #{clip_get_text_features.1} parent=1 // pred_check_branch
      %37 = sbr.rel (0) target = $region29
    $region28: #{clip_get_text_features.1} parent=1 // pred_region
      _
    $region29: #{clip_get_text_features.1} parent=1 // pred_fallthru
      _
    // Predicated region
    $region30: #{clip_get_text_features.1} parent=1 // pred_check
      _
    $region31: #{clip_get_text_features.1} parent=1 // pred_check_branch
      %39 = sbr.rel (0) target = $region33
    $region32: #{clip_get_text_features.1} parent=1 // pred_region
      _
    $region33: #{clip_get_text_features.1} parent=1 // pred_fallthru
      _
    // Predicated region
    $region34: #{clip_get_text_features.1} parent=1 // pred_check
      _
    $region35: #{clip_get_text_features.1} parent=1 // pred_check_branch
      %41 = sbr.rel (0) target = $region37
    $region36: #{clip_get_text_features.1} parent=1 // pred_region
      _
    $region37: #{clip_get_text_features.1} parent=1 // pred_fallthru
      _
    // Predicated region
    $region38: #{clip_get_text_features.1} parent=1 // pred_check
      _
    $region39: #{clip_get_text_features.1} parent=1 // pred_check_branch
      %43 = sbr.rel (0) target = $region41
    $region40: #{clip_get_text_features.1} parent=1 // pred_region
      _
    $region41: #{clip_get_text_features.1} parent=1 // pred_fallthru
      _
    // Predicated region
    $region42: #{clip_get_text_features.1} parent=1 // pred_check
      _
    $region43: #{clip_get_text_features.1} parent=1 // pred_check_branch
      %45 = sbr.rel (0) target = $region45
    $region44: #{clip_get_text_features.1} parent=1 // pred_region
      _
    $region45: #{clip_get_text_features.1} parent=1 // pred_fallthru
      _
    %v47 = vld [vmem:[%s1] sm:$0xff]
    %v48 = vld [vmem:[%s1 + $0x8] sm:$0xff]
    %v49 = vld [vmem:[%s2] sm:$0x1]
    %vm50 = vcmp.gt.s32.totalorder %v49, 0
    %v51 = vlaneseq
    %v52 = vshrl.u32 %v51, 7
    %v53 = vadd.s32 %v52, 8
    %v54 = vlaneseq
    %v55 = vand.u32 %v54, 127
    %vm56 = vcmp.ge.s32.totalorder %v52, 0
    %vm57 = vcmp.ge.s32.totalorder %v53, 0
    %vm58 = vcmp.lt.s32.totalorder %v52, 8
    %vm59 = vcmp.lt.s32.totalorder %v53, 8
    %vm60 = vmand %vm56, %vm58
    %vm61 = vmand %vm57, %vm59
    %vm62 = vcmp.ge.s32.totalorder %v55, 0
    %vm63 = vcmp.lt.s32.totalorder %v55, 8
    %vm64 = vmand %vm62, %vm63
    %vm65 = vmand %vm60, %vm64
    %vm66 = vmand %vm61, %vm64
    %vm67 = vcmp.ge.s32.totalorder %v52, 8
    %vm68 = vcmp.ge.s32.totalorder %v53, 8
    %vm69 = vcmp.lt.s32.totalorder %v52, 16
    %vm70 = vcmp.lt.s32.totalorder %v53, 16
    %vm71 = vmand %vm67, %vm69
    %vm72 = vmand %vm68, %vm70
    %vm73 = vcmp.ge.s32.totalorder %v55, 8
    %vm74 = vcmp.lt.s32.totalorder %v55, 16
    %vm75 = vmand %vm73, %vm74
    %vm76 = vmand %vm71, %vm75
    %vm77 = vmand %vm72, %vm75
    %vm78 = vmor %vm65, %vm76
    %vm79 = vmor %vm66, %vm77
    %vm80 = vcmp.ge.s32.totalorder %v52, %v55
    %vm81 = vcmp.ge.s32.totalorder %v53, %v55
    %vm82 = vmand %vm78, %vm80
    %vm83 = vmand %vm79, %vm81
    %v84 = vsel %vm50, 1, 0
    %v85 = vlaneseq
    %v86 = vshrl.u32 %v85, 7
    %v87 = vsub.s32 0, %v86
    %v88 = vrot.slane %v84, %v87
    %vm89 = vcmp.eq.s32.totalorder %v88, 1
    %vm90 = vmand %vm82, %vm89
    %vm91 = vmand %vm83, %vm89
    %v92 = vsel %vm90, 0.0, -1e+09
    %v93 = vsel %vm91, 0.0, -1e+09
    %v94 = vld [vmem:[%s6] sm:$0x1]
    %v95 = vld [vmem:[%s6 + $0x1] sm:$0x1]
    %v96 = vld [vmem:[%s6 + $0x2] sm:$0x1]
    %v97 = vld [vmem:[%s6 + $0x3] sm:$0x1]
    %v98 = vld [vmem:[%s6 + $0x4] sm:$0x1]
    %v99 = vld [vmem:[%s6 + $0x5] sm:$0x1]
    %vm100 = vcmask 261120
    %v101 = vsel %vm100, %v47, 0.0
    %102 = vadd.xlane.f32.xlu0 %v101
    %v103 = vpop.xlane.xlu0 %102
    %v104 = vsel %vm100, %v48, 0.0
    %105 = vadd.xlane.f32.xlu0 %v104
    %v106 = vpop.xlane.xlu0 %105
    %v107 = vrcp.pop 32.0
    %v108 = vmul.f32 %v103, %v107
    %v109 = vmul.f32 %v106, %v107
    %v110 = vsub.f32 %v47, %v108
    %v111 = vsub.f32 %v48, %v109
    %v112 = vmul.f32 %v110, %v110
    %v113 = vmul.f32 %v111, %v111
    %v114 = vsel %vm100, %v112, 0.0
    %115 = vadd.xlane.f32.xlu0 %v114
    %v116 = vpop.xlane.xlu0 %115
    %v117 = vsel %vm100, %v113, 0.0
    %118 = vadd.xlane.f32.xlu0 %v117
    %v119 = vpop.xlane.xlu0 %118
    %v120 = vmul.f32 %v116, %v107
    %v121 = vmul.f32 %v119, %v107
    %v122 = vadd.f32 %v120, 1e-05
    %v123 = vadd.f32 %v121, 1e-05
    %v124 = vrsqrt.pop %v122
    %v125 = vrsqrt.pop %v123
    %v126 = vmul.f32 %v110, %v124
    %v127 = vmul.f32 %v111, %v125
    %v128 = vlaneseq
    %v129 = vshrl.u32 %v128, 7
    %v130 = vsub.s32 0, %v129
    %v131 = vrot.slane %v94, %v130
    %v132 = vmul.f32 %v126, %v131
    %v133 = vmul.f32 %v127, %v131
    %v134 = vlaneseq
    %v135 = vshrl.u32 %v134, 7
    %v136 = vsub.s32 0, %v135
    %v137 = vrot.slane %v95, %v136
    %v138 = vadd.f32 %v132, %v137
    %v139 = vadd.f32 %v133, %v137
    %v140 = vpack.c.bf16 %v139, %v138
    %v141 = vld [vmem:[%s3] sm:$0xf]
    %v142 = vld [vmem:[%s3 + $0x4] sm:$0xf]
    %v143 = vld [vmem:[%s3 + $0x8] sm:$0xf]
    %v144 = vld [vmem:[%s3 + $0xc] sm:$0xf]
    %v145 = vld [vmem:[%s4] sm:$0x1]
    %v147 = vlaneseq
    %v148 = vshrl.u32 %v147, 7
    %v149 = vsub.s32 0, %v148
    %v150 = vrot.slane %v145, %v149
    %v156 = vunpack.c.l.b16 %v141
    %v157 = vunpack.c.l.b16 %v142
    %v158 = vunpack.c.l.b16 %v143
    %v159 = vunpack.c.l.b16 %v144
    %v160 = vpack.c.b16 %v157, %v156
    %v161 = vpack.c.b16 %v159, %v158
    %v165 = vsel %vm100, %v140, 0
    %167 = vmatprep.subr.bf16.mxu0 0
    %168 = vmatpush1.bf16.msra.mxu0 %v160
    %169 = vmatprep.subr.bf16.mxu0 0
    %170 = vmatpush1.bf16.msra.mxu0 %v161
    %171 = vmatprep.subr.bf16.mxu0 0
    %172 = vmatpush1.bf16.msra.mxu0 0
    %173 = vmatprep.subr.bf16.mxu0 0
    %174 = vmatpush1.bf16.msra.mxu0 0
    %175 = vmatprep.subr.bf16.mxu0 0
    %176 = vmatpush1.bf16.msra.mxu0 0
    %177 = vmatprep.subr.bf16.mxu0 0
    %178 = vmatpush1.bf16.msra.mxu0 0
    %179 = vmatprep.subr.bf16.mxu0 0
    %180 = vmatpush1.bf16.msra.mxu0 0
    %181 = vmatprep.subr.bf16.mxu0 0
    %182 = vmatpush1.bf16.msra.mxu0 0
    %183 = vmatprep.subr.bf16.mxu0 0
    %184 = vmatpush1.bf16.msra.mxu0 0
    %185 = vmatprep.subr.bf16.mxu0 0
    %186 = vmatpush1.bf16.msra.mxu0 0
    %187 = vmatprep.subr.bf16.mxu0 0
    %188 = vmatpush1.bf16.msra.mxu0 0
    %189 = vmatprep.subr.bf16.mxu0 0
    %190 = vmatpush1.bf16.msra.mxu0 0
    %191 = vmatprep.subr.bf16.mxu0 0
    %192 = vmatpush1.bf16.msra.mxu0 0
    %193 = vmatprep.subr.bf16.mxu0 0
    %194 = vmatpush1.bf16.msra.mxu0 0
    %195 = vmatprep.subr.bf16.mxu0 0
    %196 = vmatpush1.bf16.msra.mxu0 0
    %197 = vmatprep.subr.bf16.mxu0 0
    %198 = vmatpush1.bf16.msra.mxu0 0
    %199 = vmatprep.mubr.bf16.mxu0 0
    %200 = vmatmul.mubr.bf16.gmra.mrb[0].mxu0 %v165
    %v201 = vpop.f32.mrb[0].mxu0
    %v202 = vadd.f32 %v150, %v201
    %v203 = vpop.f32.mrb[0].mxu0
    %v204 = vpop.f32.mrb[0].mxu0
    %v205 = vadd.f32 %v150, %v204
    %v206 = vpop.f32.mrb[0].mxu0
    %207 = vdwg.mxu0
    %v208 = vpack.c.bf16 %v205, %v202
    %210 = vrot.lane.b32.xlu0 %v208, 96
    %v211 = vpop.permute.xlu0 %210
    %vm212 = vcmask 64512
    %v214 = vsel %vm212, %v208, 0
    %v217 = vsel %vm212, %v211, 0
    %219 = vmatprep.subr.bf16.mxu0 0
    %220 = vmatpush1.bf16.xpose.msra.mxu0 %v217
    %221 = vmatprep.subr.bf16.mxu0 0
    %222 = vmatpush1.bf16.xpose.msra.mxu0 0
    %223 = vmatprep.subr.bf16.mxu0 0
    %224 = vmatpush1.bf16.xpose.msra.mxu0 0
    %225 = vmatprep.subr.bf16.mxu0 0
    %226 = vmatpush1.bf16.xpose.msra.mxu0 0
    %227 = vmatprep.subr.bf16.mxu0 0
    %228 = vmatpush1.bf16.xpose.msra.mxu0 0
    %229 = vmatprep.subr.bf16.mxu0 0
    %230 = vmatpush1.bf16.xpose.msra.mxu0 0
    %231 = vmatprep.subr.bf16.mxu0 0
    %232 = vmatpush1.bf16.xpose.msra.mxu0 0
    %233 = vmatprep.subr.bf16.mxu0 0
    %234 = vmatpush1.bf16.xpose.msra.mxu0 0
    %235 = vmatprep.subr.bf16.mxu0 0
    %236 = vmatpush1.bf16.xpose.msra.mxu0 0
    %237 = vmatprep.subr.bf16.mxu0 0
    %238 = vmatpush1.bf16.xpose.msra.mxu0 0
    %239 = vmatprep.subr.bf16.mxu0 0
    %240 = vmatpush1.bf16.xpose.msra.mxu0 0
    %241 = vmatprep.subr.bf16.mxu0 0
    %242 = vmatpush1.bf16.xpose.msra.mxu0 0
    %243 = vmatprep.subr.bf16.mxu0 0
    %244 = vmatpush1.bf16.xpose.msra.mxu0 0
    %245 = vmatprep.subr.bf16.mxu0 0
    %246 = vmatpush1.bf16.xpose.msra.mxu0 0
    %247 = vmatprep.subr.bf16.mxu0 0
    %248 = vmatpush1.bf16.xpose.msra.mxu0 0
    %249 = vmatprep.subr.bf16.mxu0 0
    %250 = vmatpush1.bf16.xpose.msra.mxu0 0
    %251 = vmatprep.mubr.bf16.mxu0 0
    %252 = vmatmul.mubr.bf16.gmra.mrb[0].mxu0 %v214
    %v253 = vpop.f32.mrb[0].mxu0
    %v254 = vadd.f32 %v92, %v253
    %v255 = vpop.f32.mrb[0].mxu0
    %v256 = vpop.f32.mrb[0].mxu0
    %v257 = vadd.f32 %v93, %v256
    %v258 = vpop.f32.mrb[0].mxu0
    %259 = vdwg.mxu0
    %vm260 = vcmask 130048
    %v261 = vsel %vm260, %v254, -inf
    %262 = vmax.xlane.f32.xlu0 %v261
    %v263 = vpop.xlane.xlu0 %262
    %v264 = vsel %vm260, %v257, -inf
    %265 = vmax.xlane.f32.xlu0 %v264
    %v266 = vpop.xlane.xlu0 %265
    %v267 = vsub.f32 %v254, %v263
    %v268 = vsub.f32 %v257, %v266
    %v269 = vmul.f32 %v267, 1.442695
    %v270 = vpow.pop %v269
    %v271 = vmul.f32 %v268, 1.442695
    %v272 = vpow.pop %v271
    %v273 = vsel %vm260, %v270, 0.0
    %274 = vadd.xlane.f32.xlu0 %v273
    %v275 = vpop.xlane.xlu0 %274
    %v276 = vsel %vm260, %v272, 0.0
    %277 = vadd.xlane.f32.xlu0 %v276
    %v278 = vpop.xlane.xlu0 %277
    %v279 = vrcp.pop %v275
    %v280 = vrcp.pop %v278
    %v281 = vmul.f32 %v270, %v279
    %v282 = vmul.f32 %v272, %v280
    %v283 = vpack.c.bf16 %v282, %v281
    %284 = vrot.lane.b32.xlu0 %v208, 64
    %v285 = vpop.permute.xlu0 %284
    %v288 = vsel %vm260, %v283, 0
    %290 = vmatprep.subr.bf16.mxu0 0
    %291 = vmatpush1.bf16.msra.mxu0 %v285
    %292 = vmatprep.subr.bf16.mxu0 0
    %293 = vmatpush1.bf16.msra.mxu0 0
    %294 = vmatprep.subr.bf16.mxu0 0
    %295 = vmatpush1.bf16.msra.mxu0 0
    %296 = vmatprep.subr.bf16.mxu0 0
    %297 = vmatpush1.bf16.msra.mxu0 0
    %298 = vmatprep.subr.bf16.mxu0 0
    %299 = vmatpush1.bf16.msra.mxu0 0
    %300 = vmatprep.subr.bf16.mxu0 0
    %301 = vmatpush1.bf16.msra.mxu0 0
    %302 = vmatprep.subr.bf16.mxu0 0
    %303 = vmatpush1.bf16.msra.mxu0 0
    %304 = vmatprep.subr.bf16.mxu0 0
    %305 = vmatpush1.bf16.msra.mxu0 0
    %306 = vmatprep.subr.bf16.mxu0 0
    %307 = vmatpush1.bf16.msra.mxu0 0
    %308 = vmatprep.subr.bf16.mxu0 0
    %309 = vmatpush1.bf16.msra.mxu0 0
    %310 = vmatprep.subr.bf16.mxu0 0
    %311 = vmatpush1.bf16.msra.mxu0 0
    %312 = vmatprep.subr.bf16.mxu0 0
    %313 = vmatpush1.bf16.msra.mxu0 0
    %314 = vmatprep.subr.bf16.mxu0 0
    %315 = vmatpush1.bf16.msra.mxu0 0
    %316 = vmatprep.subr.bf16.mxu0 0
    %317 = vmatpush1.bf16.msra.mxu0 0
    %318 = vmatprep.subr.bf16.mxu0 0
    %319 = vmatpush1.bf16.msra.mxu0 0
    %320 = vmatprep.subr.bf16.mxu0 0
    %321 = vmatpush1.bf16.msra.mxu0 0
    %322 = vmatprep.mubr.bf16.mxu0 0
    %323 = vmatmul.mubr.bf16.gmra.mrb[0].mxu0 %v288
    %v324 = vpop.f32.mrb[0].mxu0
    %v325 = vadd.f32 0.0, %v324
    %v326 = vpop.f32.mrb[0].mxu0
    %v327 = vpop.f32.mrb[0].mxu0
    %v328 = vadd.f32 0.0, %v327
    %v329 = vpop.f32.mrb[0].mxu0
    %330 = vdwg.mxu0
    %331 = vrot.lane.b32.xlu0 %v208, 120
    %v332 = vpop.permute.xlu0 %331
    %333 = vrot.lane.b32.xlu0 %v208, 88
    %v334 = vpop.permute.xlu0 %333
    %v336 = vsel %vm212, %v332, 0
    %v339 = vsel %vm212, %v334, 0
    %341 = vmatprep.subr.bf16.mxu0 0
    %342 = vmatpush1.bf16.xpose.msra.mxu0 %v339
    %343 = vmatprep.subr.bf16.mxu0 0
    %344 = vmatpush1.bf16.xpose.msra.mxu0 0
    %345 = vmatprep.subr.bf16.mxu0 0
    %346 = vmatpush1.bf16.xpose.msra.mxu0 0
    %347 = vmatprep.subr.bf16.mxu0 0
    %348 = vmatpush1.bf16.xpose.msra.mxu0 0
    %349 = vmatprep.subr.bf16.mxu0 0
    %350 = vmatpush1.bf16.xpose.msra.mxu0 0
    %351 = vmatprep.subr.bf16.mxu0 0
    %352 = vmatpush1.bf16.xpose.msra.mxu0 0
    %353 = vmatprep.subr.bf16.mxu0 0
    %354 = vmatpush1.bf16.xpose.msra.mxu0 0
    %355 = vmatprep.subr.bf16.mxu0 0
    %356 = vmatpush1.bf16.xpose.msra.mxu0 0
    %357 = vmatprep.subr.bf16.mxu0 0
    %358 = vmatpush1.bf16.xpose.msra.mxu0 0
    %359 = vmatprep.subr.bf16.mxu0 0
    %360 = vmatpush1.bf16.xpose.msra.mxu0 0
    %361 = vmatprep.subr.bf16.mxu0 0
    %362 = vmatpush1.bf16.xpose.msra.mxu0 0
    %363 = vmatprep.subr.bf16.mxu0 0
    %364 = vmatpush1.bf16.xpose.msra.mxu0 0
    %365 = vmatprep.subr.bf16.mxu0 0
    %366 = vmatpush1.bf16.xpose.msra.mxu0 0
    %367 = vmatprep.subr.bf16.mxu0 0
    %368 = vmatpush1.bf16.xpose.msra.mxu0 0
    %369 = vmatprep.subr.bf16.mxu0 0
    %370 = vmatpush1.bf16.xpose.msra.mxu0 0
    %371 = vmatprep.subr.bf16.mxu0 0
    %372 = vmatpush1.bf16.xpose.msra.mxu0 0
    %373 = vmatprep.mubr.bf16.mxu0 0
    %374 = vmatmul.mubr.bf16.gmra.mrb[0].mxu0 %v336
    %v375 = vpop.f32.mrb[0].mxu0
    %v376 = vadd.f32 %v92, %v375
    %v377 = vpop.f32.mrb[0].mxu0
    %v378 = vpop.f32.mrb[0].mxu0
    %v379 = vadd.f32 %v93, %v378
    %v380 = vpop.f32.mrb[0].mxu0
    %381 = vdwg.mxu0
    %v382 = vsel %vm260, %v376, -inf
    %383 = vmax.xlane.f32.xlu0 %v382
    %v384 = vpop.xlane.xlu0 %383
    %v385 = vsel %vm260, %v379, -inf
    %386 = vmax.xlane.f32.xlu0 %v385
    %v387 = vpop.xlane.xlu0 %386
    %v388 = vsub.f32 %v376, %v384
    %v389 = vsub.f32 %v379, %v387
    %v390 = vmul.f32 %v388, 1.442695
    %v391 = vpow.pop %v390
    %v392 = vmul.f32 %v389, 1.442695
    %v393 = vpow.pop %v392
    %v394 = vsel %vm260, %v391, 0.0
    %395 = vadd.xlane.f32.xlu0 %v394
    %v396 = vpop.xlane.xlu0 %395
    %v397 = vsel %vm260, %v393, 0.0
    %398 = vadd.xlane.f32.xlu0 %v397
    %v399 = vpop.xlane.xlu0 %398
    %v400 = vrcp.pop %v396
    %v401 = vrcp.pop %v399
    %v402 = vmul.f32 %v391, %v400
    %v403 = vmul.f32 %v393, %v401
    %v404 = vpack.c.bf16 %v403, %v402
    %405 = vrot.lane.b32.xlu0 %v208, 56
    %v406 = vpop.permute.xlu0 %405
    %v409 = vsel %vm260, %v404, 0
    %411 = vmatprep.subr.bf16.mxu0 0
    %412 = vmatpush1.bf16.msra.mxu0 %v406
    %413 = vmatprep.subr.bf16.mxu0 0
    %414 = vmatpush1.bf16.msra.mxu0 0
    %415 = vmatprep.subr.bf16.mxu0 0
    %416 = vmatpush1.bf16.msra.mxu0 0
    %417 = vmatprep.subr.bf16.mxu0 0
    %418 = vmatpush1.bf16.msra.mxu0 0
    %419 = vmatprep.subr.bf16.mxu0 0
    %420 = vmatpush1.bf16.msra.mxu0 0
    %421 = vmatprep.subr.bf16.mxu0 0
    %422 = vmatpush1.bf16.msra.mxu0 0
    %423 = vmatprep.subr.bf16.mxu0 0
    %424 = vmatpush1.bf16.msra.mxu0 0
    %425 = vmatprep.subr.bf16.mxu0 0
    %426 = vmatpush1.bf16.msra.mxu0 0
    %427 = vmatprep.subr.bf16.mxu0 0
    %428 = vmatpush1.bf16.msra.mxu0 0
    %429 = vmatprep.subr.bf16.mxu0 0
    %430 = vmatpush1.bf16.msra.mxu0 0
    %431 = vmatprep.subr.bf16.mxu0 0
    %432 = vmatpush1.bf16.msra.mxu0 0
    %433 = vmatprep.subr.bf16.mxu0 0
    %434 = vmatpush1.bf16.msra.mxu0 0
    %435 = vmatprep.subr.bf16.mxu0 0
    %436 = vmatpush1.bf16.msra.mxu0 0
    %437 = vmatprep.subr.bf16.mxu0 0
    %438 = vmatpush1.bf16.msra.mxu0 0
    %439 = vmatprep.subr.bf16.mxu0 0
    %440 = vmatpush1.bf16.msra.mxu0 0
    %441 = vmatprep.subr.bf16.mxu0 0
    %442 = vmatpush1.bf16.msra.mxu0 0
    %443 = vmatprep.mubr.bf16.mxu0 0
    %444 = vmatmul.mubr.bf16.gmra.mrb[0].mxu0 %v409
    %v445 = vpop.f32.mrb[0].mxu0
    %v446 = vadd.f32 0.0, %v445
    %v447 = vpop.f32.mrb[0].mxu0
    %v448 = vpop.f32.mrb[0].mxu0
    %v449 = vadd.f32 0.0, %v448
    %v450 = vpop.f32.mrb[0].mxu0
    %451 = vdwg.mxu0
    %452 = vrot.lane.b32.xlu0 %v208, 112
    %v453 = vpop.permute.xlu0 %452
    %454 = vrot.lane.b32.xlu0 %v208, 80
    %v455 = vpop.permute.xlu0 %454
    %v457 = vsel %vm212, %v453, 0
    %v460 = vsel %vm212, %v455, 0
    %462 = vmatprep.subr.bf16.mxu0 0
    %463 = vmatpush1.bf16.xpose.msra.mxu0 %v460
    %464 = vmatprep.subr.bf16.mxu0 0
    %465 = vmatpush1.bf16.xpose.msra.mxu0 0
    %466 = vmatprep.subr.bf16.mxu0 0
    %467 = vmatpush1.bf16.xpose.msra.mxu0 0
    %468 = vmatprep.subr.bf16.mxu0 0
    %469 = vmatpush1.bf16.xpose.msra.mxu0 0
    %470 = vmatprep.subr.bf16.mxu0 0
    %471 = vmatpush1.bf16.xpose.msra.mxu0 0
    %472 = vmatprep.subr.bf16.mxu0 0
    %473 = vmatpush1.bf16.xpose.msra.mxu0 0
    %474 = vmatprep.subr.bf16.mxu0 0
    %475 = vmatpush1.bf16.xpose.msra.mxu0 0
    %476 = vmatprep.subr.bf16.mxu0 0
    %477 = vmatpush1.bf16.xpose.msra.mxu0 0
    %478 = vmatprep.subr.bf16.mxu0 0
    %479 = vmatpush1.bf16.xpose.msra.mxu0 0
    %480 = vmatprep.subr.bf16.mxu0 0
    %481 = vmatpush1.bf16.xpose.msra.mxu0 0
    %482 = vmatprep.subr.bf16.mxu0 0
    %483 = vmatpush1.bf16.xpose.msra.mxu0 0
    %484 = vmatprep.subr.bf16.mxu0 0
    %485 = vmatpush1.bf16.xpose.msra.mxu0 0
    %486 = vmatprep.subr.bf16.mxu0 0
    %487 = vmatpush1.bf16.xpose.msra.mxu0 0
    %488 = vmatprep.subr.bf16.mxu0 0
    %489 = vmatpush1.bf16.xpose.msra.mxu0 0
    %490 = vmatprep.subr.bf16.mxu0 0
    %491 = vmatpush1.bf16.xpose.msra.mxu0 0
    %492 = vmatprep.subr.bf16.mxu0 0
    %493 = vmatpush1.bf16.xpose.msra.mxu0 0
    %494 = vmatprep.mubr.bf16.mxu0 0
    %495 = vmatmul.mubr.bf16.gmra.mrb[0].mxu0 %v457
    %v496 = vpop.f32.mrb[0].mxu0
    %v497 = vadd.f32 %v92, %v496
    %v498 = vpop.f32.mrb[0].mxu0
    %v499 = vpop.f32.mrb[0].mxu0
    %v500 = vadd.f32 %v93, %v499
    %v501 = vpop.f32.mrb[0].mxu0
    %502 = vdwg.mxu0
    %v503 = vsel %vm260, %v497, -inf
    %504 = vmax.xlane.f32.xlu0 %v503
    %v505 = vpop.xlane.xlu0 %504
    %v506 = vsel %vm260, %v500, -inf
    %507 = vmax.xlane.f32.xlu0 %v506
    %v508 = vpop.xlane.xlu0 %507
    %v509 = vsub.f32 %v497, %v505
    %v510 = vsub.f32 %v500, %v508
    %v511 = vmul.f32 %v509, 1.442695
    %v512 = vpow.pop %v511
    %v513 = vmul.f32 %v510, 1.442695
    %v514 = vpow.pop %v513
    %v515 = vsel %vm260, %v512, 0.0
    %516 = vadd.xlane.f32.xlu0 %v515
    %v517 = vpop.xlane.xlu0 %516
    %v518 = vsel %vm260, %v514, 0.0
    %519 = vadd.xlane.f32.xlu0 %v518
    %v520 = vpop.xlane.xlu0 %519
    %v521 = vrcp.pop %v517
    %v522 = vrcp.pop %v520
    %v523 = vmul.f32 %v512, %v521
    %v524 = vmul.f32 %v514, %v522
    %v525 = vpack.c.bf16 %v524, %v523
    %526 = vrot.lane.b32.xlu0 %v208, 48
    %v527 = vpop.permute.xlu0 %526
    %v530 = vsel %vm260, %v525, 0
    %532 = vmatprep.subr.bf16.mxu0 0
    %533 = vmatpush1.bf16.msra.mxu0 %v527
    %534 = vmatprep.subr.bf16.mxu0 0
    %535 = vmatpush1.bf16.msra.mxu0 0
    %536 = vmatprep.subr.bf16.mxu0 0
    %537 = vmatpush1.bf16.msra.mxu0 0
    %538 = vmatprep.subr.bf16.mxu0 0
    %539 = vmatpush1.bf16.msra.mxu0 0
    %540 = vmatprep.subr.bf16.mxu0 0
    %541 = vmatpush1.bf16.msra.mxu0 0
    %542 = vmatprep.subr.bf16.mxu0 0
    %543 = vmatpush1.bf16.msra.mxu0 0
    %544 = vmatprep.subr.bf16.mxu0 0
    %545 = vmatpush1.bf16.msra.mxu0 0
    %546 = vmatprep.subr.bf16.mxu0 0
    %547 = vmatpush1.bf16.msra.mxu0 0
    %548 = vmatprep.subr.bf16.mxu0 0
    %549 = vmatpush1.bf16.msra.mxu0 0
    %550 = vmatprep.subr.bf16.mxu0 0
    %551 = vmatpush1.bf16.msra.mxu0 0
    %552 = vmatprep.subr.bf16.mxu0 0
    %553 = vmatpush1.bf16.msra.mxu0 0
    %554 = vmatprep.subr.bf16.mxu0 0
    %555 = vmatpush1.bf16.msra.mxu0 0
    %556 = vmatprep.subr.bf16.mxu0 0
    %557 = vmatpush1.bf16.msra.mxu0 0
    %558 = vmatprep.subr.bf16.mxu0 0
    %559 = vmatpush1.bf16.msra.mxu0 0
    %560 = vmatprep.subr.bf16.mxu0 0
    %561 = vmatpush1.bf16.msra.mxu0 0
    %562 = vmatprep.subr.bf16.mxu0 0
    %563 = vmatpush1.bf16.msra.mxu0 0
    %564 = vmatprep.mubr.bf16.mxu0 0
    %565 = vmatmul.mubr.bf16.gmra.mrb[0].mxu0 %v530
    %v566 = vpop.f32.mrb[0].mxu0
    %v567 = vadd.f32 0.0, %v566
    %v568 = vpop.f32.mrb[0].mxu0
    %v569 = vpop.f32.mrb[0].mxu0
    %v570 = vadd.f32 0.0, %v569
    %v571 = vpop.f32.mrb[0].mxu0
    %572 = vdwg.mxu0
    %573 = vrot.lane.b32.xlu0 %v208, 104
    %v574 = vpop.permute.xlu0 %573
    %575 = vrot.lane.b32.xlu0 %v208, 72
    %v576 = vpop.permute.xlu0 %575
    %v578 = vsel %vm212, %v574, 0
    %v581 = vsel %vm212, %v576, 0
    %583 = vmatprep.subr.bf16.mxu0 0
    %584 = vmatpush1.bf16.xpose.msra.mxu0 %v581
    %585 = vmatprep.subr.bf16.mxu0 0
    %586 = vmatpush1.bf16.xpose.msra.mxu0 0
    %587 = vmatprep.subr.bf16.mxu0 0
    %588 = vmatpush1.bf16.xpose.msra.mxu0 0
    %589 = vmatprep.subr.bf16.mxu0 0
    %590 = vmatpush1.bf16.xpose.msra.mxu0 0
    %591 = vmatprep.subr.bf16.mxu0 0
    %592 = vmatpush1.bf16.xpose.msra.mxu0 0
    %593 = vmatprep.subr.bf16.mxu0 0
    %594 = vmatpush1.bf16.xpose.msra.mxu0 0
    %595 = vmatprep.subr.bf16.mxu0 0
    %596 = vmatpush1.bf16.xpose.msra.mxu0 0
    %597 = vmatprep.subr.bf16.mxu0 0
    %598 = vmatpush1.bf16.xpose.msra.mxu0 0
    %599 = vmatprep.subr.bf16.mxu0 0
    %600 = vmatpush1.bf16.xpose.msra.mxu0 0
    %601 = vmatprep.subr.bf16.mxu0 0
    %602 = vmatpush1.bf16.xpose.msra.mxu0 0
    %603 = vmatprep.subr.bf16.mxu0 0
    %604 = vmatpush1.bf16.xpose.msra.mxu0 0
    %605 = vmatprep.subr.bf16.mxu0 0
    %606 = vmatpush1.bf16.xpose.msra.mxu0 0
    %607 = vmatprep.subr.bf16.mxu0 0
    %608 = vmatpush1.bf16.xpose.msra.mxu0 0
    %609 = vmatprep.subr.bf16.mxu0 0
    %610 = vmatpush1.bf16.xpose.msra.mxu0 0
    %611 = vmatprep.subr.bf16.mxu0 0
    %612 = vmatpush1.bf16.xpose.msra.mxu0 0
    %613 = vmatprep.subr.bf16.mxu0 0
    %614 = vmatpush1.bf16.xpose.msra.mxu0 0
    %615 = vmatprep.mubr.bf16.mxu0 0
    %616 = vmatmul.mubr.bf16.gmra.mrb[0].mxu0 %v578
    %v617 = vpop.f32.mrb[0].mxu0
    %v618 = vadd.f32 %v92, %v617
    %v619 = vpop.f32.mrb[0].mxu0
    %v620 = vpop.f32.mrb[0].mxu0
    %v621 = vadd.f32 %v93, %v620
    %v622 = vpop.f32.mrb[0].mxu0
    %623 = vdwg.mxu0
    %v624 = vsel %vm260, %v618, -inf
    %625 = vmax.xlane.f32.xlu0 %v624
    %v626 = vpop.xlane.xlu0 %625
    %v627 = vsel %vm260, %v621, -inf
    %628 = vmax.xlane.f32.xlu0 %v627
    %v629 = vpop.xlane.xlu0 %628
    %v630 = vsub.f32 %v618, %v626
    %v631 = vsub.f32 %v621, %v629
    %v632 = vmul.f32 %v630, 1.442695
    %v633 = vpow.pop %v632
    %v634 = vmul.f32 %v631, 1.442695
    %v635 = vpow.pop %v634
    %v636 = vsel %vm260, %v633, 0.0
    %637 = vadd.xlane.f32.xlu0 %v636
    %v638 = vpop.xlane.xlu0 %637
    %v639 = vsel %vm260, %v635, 0.0
    %640 = vadd.xlane.f32.xlu0 %v639
    %v641 = vpop.xlane.xlu0 %640
    %v642 = vrcp.pop %v638
    %v643 = vrcp.pop %v641
    %v644 = vmul.f32 %v633, %v642
    %v645 = vmul.f32 %v635, %v643
    %v646 = vpack.c.bf16 %v645, %v644
    %647 = vrot.lane.b32.xlu0 %v208, 40
    %v648 = vpop.permute.xlu0 %647
    %v651 = vsel %vm260, %v646, 0
    %653 = vmatprep.subr.bf16.mxu0 0
    %654 = vmatpush1.bf16.msra.mxu0 %v648
    %655 = vmatprep.subr.bf16.mxu0 0
    %656 = vmatpush1.bf16.msra.mxu0 0
    %657 = vmatprep.subr.bf16.mxu0 0
    %658 = vmatpush1.bf16.msra.mxu0 0
    %659 = vmatprep.subr.bf16.mxu0 0
    %660 = vmatpush1.bf16.msra.mxu0 0
    %661 = vmatprep.subr.bf16.mxu0 0
    %662 = vmatpush1.bf16.msra.mxu0 0
    %663 = vmatprep.subr.bf16.mxu0 0
    %664 = vmatpush1.bf16.msra.mxu0 0
    %665 = vmatprep.subr.bf16.mxu0 0
    %666 = vmatpush1.bf16.msra.mxu0 0
    %667 = vmatprep.subr.bf16.mxu0 0
    %668 = vmatpush1.bf16.msra.mxu0 0
    %669 = vmatprep.subr.bf16.mxu0 0
    %670 = vmatpush1.bf16.msra.mxu0 0
    %671 = vmatprep.subr.bf16.mxu0 0
    %672 = vmatpush1.bf16.msra.mxu0 0
    %673 = vmatprep.subr.bf16.mxu0 0
    %674 = vmatpush1.bf16.msra.mxu0 0
    %675 = vmatprep.subr.bf16.mxu0 0
    %676 = vmatpush1.bf16.msra.mxu0 0
    %677 = vmatprep.subr.bf16.mxu0 0
    %678 = vmatpush1.bf16.msra.mxu0 0
    %679 = vmatprep.subr.bf16.mxu0 0
    %680 = vmatpush1.bf16.msra.mxu0 0
    %681 = vmatprep.subr.bf16.mxu0 0
    %682 = vmatpush1.bf16.msra.mxu0 0
    %683 = vmatprep.subr.bf16.mxu0 0
    %684 = vmatpush1.bf16.msra.mxu0 0
    %685 = vmatprep.mubr.bf16.mxu0 0
    %686 = vmatmul.mubr.bf16.gmra.mrb[0].mxu0 %v651
    %v687 = vpop.f32.mrb[0].mxu0
    %v688 = vadd.f32 0.0, %v687
    %v689 = vpop.f32.mrb[0].mxu0
    %v690 = vpop.f32.mrb[0].mxu0
    %v691 = vadd.f32 0.0, %v690
    %v692 = vpop.f32.mrb[0].mxu0
    %693 = vdwg.mxu0
    %696 = vrot.lane.b32.xlu0 %v446, 8
    %v697 = vpop.permute.xlu0 %696
    %698 = vrot.lane.b32.xlu0 %v449, 8
    %v699 = vpop.permute.xlu0 %698
    %704 = vrot.lane.b32.xlu0 %v567, 16
    %v705 = vpop.permute.xlu0 %704
    %706 = vrot.lane.b32.xlu0 %v570, 16
    %v707 = vpop.permute.xlu0 %706
    %712 = vrot.lane.b32.xlu0 %v688, 24
    %v713 = vpop.permute.xlu0 %712
    %714 = vrot.lane.b32.xlu0 %v691, 24
    %v715 = vpop.permute.xlu0 %714
    %v718 = vsel %vm212, %v325, %v697
    %v719 = vsel %vm212, %v328, %v699
    %v720 = vsel %vm260, %v718, %v705
    %v721 = vsel %vm260, %v719, %v707
    %vm722 = vcmask 195584
    %v723 = vsel %vm722, %v720, %v713
    %v724 = vsel %vm722, %v721, %v715
    %v725 = vpack.c.bf16 %v724, %v723
    %v726 = vld [vmem:[%s5] sm:$0xf]
    %v727 = vld [vmem:[%s5 + $0x4] sm:$0xf]
    %v728 = vld [vmem:[%s5 + $0x8] sm:$0xf]
    %v729 = vld [vmem:[%s5 + $0xc] sm:$0xf]
    %v734 = vunpack.c.l.b16 %v726
    %v735 = vunpack.c.l.b16 %v727
    %v736 = vunpack.c.l.b16 %v728
    %v737 = vunpack.c.l.b16 %v729
    %v738 = vpack.c.b16 %v735, %v734
    %v739 = vpack.c.b16 %v737, %v736
    %v743 = vsel %vm100, %v725, 0
    %745 = vmatprep.subr.bf16.mxu0 0
    %746 = vmatpush1.bf16.msra.mxu0 %v738
    %747 = vmatprep.subr.bf16.mxu0 0
    %748 = vmatpush1.bf16.msra.mxu0 %v739
    %749 = vmatprep.subr.bf16.mxu0 0
    %750 = vmatpush1.bf16.msra.mxu0 0
    %751 = vmatprep.subr.bf16.mxu0 0
    %752 = vmatpush1.bf16.msra.mxu0 0
    %753 = vmatprep.subr.bf16.mxu0 0
    %754 = vmatpush1.bf16.msra.mxu0 0
    %755 = vmatprep.subr.bf16.mxu0 0
    %756 = vmatpush1.bf16.msra.mxu0 0
    %757 = vmatprep.subr.bf16.mxu0 0
    %758 = vmatpush1.bf16.msra.mxu0 0
    %759 = vmatprep.subr.bf16.mxu0 0
    %760 = vmatpush1.bf16.msra.mxu0 0
    %761 = vmatprep.subr.bf16.mxu0 0
    %762 = vmatpush1.bf16.msra.mxu0 0
    %763 = vmatprep.subr.bf16.mxu0 0
    %764 = vmatpush1.bf16.msra.mxu0 0
    %765 = vmatprep.subr.bf16.mxu0 0
    %766 = vmatpush1.bf16.msra.mxu0 0
    %767 = vmatprep.subr.bf16.mxu0 0
    %768 = vmatpush1.bf16.msra.mxu0 0
    %769 = vmatprep.subr.bf16.mxu0 0
    %770 = vmatpush1.bf16.msra.mxu0 0
    %771 = vmatprep.subr.bf16.mxu0 0
    %772 = vmatpush1.bf16.msra.mxu0 0
    %773 = vmatprep.subr.bf16.mxu0 0
    %774 = vmatpush1.bf16.msra.mxu0 0
    %775 = vmatprep.subr.bf16.mxu0 0
    %776 = vmatpush1.bf16.msra.mxu0 0
    %777 = vmatprep.mubr.bf16.mxu0 0
    %778 = vmatmul.mubr.bf16.gmra.mrb[0].mxu0 %v743
    %v779 = vpop.f32.mrb[0].mxu0
    %v780 = vadd.f32 0.0, %v779
    %v781 = vpop.f32.mrb[0].mxu0
    %v782 = vpop.f32.mrb[0].mxu0
    %v783 = vadd.f32 0.0, %v782
    %v784 = vpop.f32.mrb[0].mxu0
    %785 = vdwg.mxu0
    %v786 = vadd.f32 %v47, %v780
    %v787 = vadd.f32 %v48, %v783
    %v788 = vlaneseq
    %v789 = vshrl.u32 %v788, 7
    %v790 = vsub.s32 0, %v789
    %v791 = vrot.slane %v98, %v790
    %v792 = vadd.f32 %v786, %v791
    %v793 = vadd.f32 %v787, %v791
    %v794 = vsel %vm100, %v792, 0.0
    %795 = vadd.xlane.f32.xlu0 %v794
    %v796 = vpop.xlane.xlu0 %795
    %v797 = vsel %vm100, %v793, 0.0
    %798 = vadd.xlane.f32.xlu0 %v797
    %v799 = vpop.xlane.xlu0 %798
    %v800 = vmul.f32 %v796, %v107
    %v801 = vmul.f32 %v799, %v107
    %v802 = vsub.f32 %v792, %v800
    %v803 = vsub.f32 %v793, %v801
    %v804 = vmul.f32 %v802, %v802
    %v805 = vmul.f32 %v803, %v803
    %v806 = vsel %vm100, %v804, 0.0
    %807 = vadd.xlane.f32.xlu0 %v806
    %v808 = vpop.xlane.xlu0 %807
    %v809 = vsel %vm100, %v805, 0.0
    %810 = vadd.xlane.f32.xlu0 %v809
    %v811 = vpop.xlane.xlu0 %810
    %v812 = vmul.f32 %v808, %v107
    %v813 = vmul.f32 %v811, %v107
    %v814 = vadd.f32 %v812, 1e-05
    %v815 = vadd.f32 %v813, 1e-05
    %v816 = vrsqrt.pop %v814
    %v817 = vrsqrt.pop %v815
    %v818 = vmul.f32 %v802, %v816
    %v819 = vmul.f32 %v803, %v817
    %v820 = vlaneseq
    %v821 = vshrl.u32 %v820, 7
    %v822 = vsub.s32 0, %v821
    %v823 = vrot.slane %v96, %v822
    %v824 = vmul.f32 %v818, %v823
    %v825 = vmul.f32 %v819, %v823
    %v826 = vlaneseq
    %v827 = vshrl.u32 %v826, 7
    %v828 = vsub.s32 0, %v827
    %v829 = vrot.slane %v97, %v828
    %v830 = vadd.f32 %v824, %v829
    %v831 = vadd.f32 %v825, %v829
    %v832 = vpack.c.bf16 %v831, %v830
    %v833 = vld [vmem:[%s7] sm:$0xf]
    %v834 = vld [vmem:[%s7 + $0x4] sm:$0xf]
    %v835 = vld [vmem:[%s7 + $0x8] sm:$0xf]
    %v836 = vld [vmem:[%s7 + $0xc] sm:$0xf]
    %v837 = vld [vmem:[%s8] sm:$0x1]
    %v839 = vlaneseq
    %v840 = vshrl.u32 %v839, 7
    %v841 = vsub.s32 0, %v840
    %v842 = vrot.slane %v837, %v841
    %v848 = vunpack.c.l.b16 %v833
    %v849 = vunpack.c.l.b16 %v834
    %v850 = vunpack.c.l.b16 %v835
    %v851 = vunpack.c.l.b16 %v836
    %v852 = vpack.c.b16 %v849, %v848
    %v853 = vpack.c.b16 %v851, %v850
    %v857 = vsel %vm100, %v832, 0
    %859 = vmatprep.subr.bf16.mxu0 0
    %860 = vmatpush1.bf16.msra.mxu0 %v852
    %861 = vmatprep.subr.bf16.mxu0 0
    %862 = vmatpush1.bf16.msra.mxu0 %v853
    %863 = vmatprep.subr.bf16.mxu0 0
    %864 = vmatpush1.bf16.msra.mxu0 0
    %865 = vmatprep.subr.bf16.mxu0 0
    %866 = vmatpush1.bf16.msra.mxu0 0
    %867 = vmatprep.subr.bf16.mxu0 0
    %868 = vmatpush1.bf16.msra.mxu0 0
    %869 = vmatprep.subr.bf16.mxu0 0
    %870 = vmatpush1.bf16.msra.mxu0 0
    %871 = vmatprep.subr.bf16.mxu0 0
    %872 = vmatpush1.bf16.msra.mxu0 0
    %873 = vmatprep.subr.bf16.mxu0 0
    %874 = vmatpush1.bf16.msra.mxu0 0
    %875 = vmatprep.subr.bf16.mxu0 0
    %876 = vmatpush1.bf16.msra.mxu0 0
    %877 = vmatprep.subr.bf16.mxu0 0
    %878 = vmatpush1.bf16.msra.mxu0 0
    %879 = vmatprep.subr.bf16.mxu0 0
    %880 = vmatpush1.bf16.msra.mxu0 0
    %881 = vmatprep.subr.bf16.mxu0 0
    %882 = vmatpush1.bf16.msra.mxu0 0
    %883 = vmatprep.subr.bf16.mxu0 0
    %884 = vmatpush1.bf16.msra.mxu0 0
    %885 = vmatprep.subr.bf16.mxu0 0
    %886 = vmatpush1.bf16.msra.mxu0 0
    %887 = vmatprep.subr.bf16.mxu0 0
    %888 = vmatpush1.bf16.msra.mxu0 0
    %889 = vmatprep.subr.bf16.mxu0 0
    %890 = vmatpush1.bf16.msra.mxu0 0
    %891 = vmatprep.mubr.bf16.mxu0 0
    %892 = vmatmul.mubr.bf16.gmra.mrb[0].mxu0 %v857
    %v893 = vpop.f32.mrb[0].mxu0
    %v894 = vadd.f32 %v842, %v893
    %v895 = vpop.f32.mrb[0].mxu0
    %v896 = vpop.f32.mrb[0].mxu0
    %v897 = vadd.f32 %v842, %v896
    %v898 = vpop.f32.mrb[0].mxu0
    %899 = vdwg.mxu0
    %v900 = vmul.f32 %v894, 1.702
    %v901 = vmul.f32 %v897, 1.702
    %v902 = vxor.u32 %v900, 2147483648
    %v903 = vxor.u32 %v901, 2147483648
    %v904 = vmul.f32 %v902, 1.442695
    %v905 = vpow.pop %v904
    %v906 = vmul.f32 %v903, 1.442695
    %v907 = vpow.pop %v906
    %v908 = vadd.f32 %v905, 1.0
    %v909 = vadd.f32 %v907, 1.0
    %v910 = vrcp.pop %v908
    %v911 = vmul.f32 1.0, %v910
    %v912 = vrcp.pop %v909
    %v913 = vmul.f32 1.0, %v912
    %v914 = vmul.f32 %v894, %v911
    %v915 = vmul.f32 %v897, %v913
    %v916 = vpack.c.bf16 %v915, %v914
    %v917 = vld [vmem:[%s9] sm:$0xf]
    %v918 = vld [vmem:[%s9 + $0x4] sm:$0xf]
    %v919 = vld [vmem:[%s9 + $0x8] sm:$0xf]
    %v920 = vld [vmem:[%s9 + $0xc] sm:$0xf]
    %v921 = vld [vmem:[%s9 + $0x10] sm:$0xf]
    %v922 = vld [vmem:[%s9 + $0x14] sm:$0xf]
    %v923 = vld [vmem:[%s9 + $0x18] sm:$0xf]
    %v924 = vld [vmem:[%s9 + $0x1c] sm:$0xf]
    %v933 = vunpack.c.l.b16 %v917
    %v934 = vunpack.c.l.b16 %v918
    %v935 = vunpack.c.l.b16 %v919
    %v936 = vunpack.c.l.b16 %v920
    %v937 = vunpack.c.l.b16 %v921
    %v938 = vunpack.c.l.b16 %v922
    %v939 = vunpack.c.l.b16 %v923
    %v940 = vunpack.c.l.b16 %v924
    %v941 = vpack.c.b16 %v934, %v933
    %v942 = vpack.c.b16 %v936, %v935
    %v943 = vpack.c.b16 %v938, %v937
    %v944 = vpack.c.b16 %v940, %v939
    %vm949 = vcmask 523264
    %v951 = vsel %vm949, %v916, 0
    %953 = vmatprep.subr.bf16.mxu0 0
    %954 = vmatpush1.bf16.msra.mxu0 %v941
    %955 = vmatprep.subr.bf16.mxu0 0
    %956 = vmatpush1.bf16.msra.mxu0 %v942
    %957 = vmatprep.subr.bf16.mxu0 0
    %958 = vmatpush1.bf16.msra.mxu0 %v943
    %959 = vmatprep.subr.bf16.mxu0 0
    %960 = vmatpush1.bf16.msra.mxu0 %v944
    %961 = vmatprep.subr.bf16.mxu0 0
    %962 = vmatpush1.bf16.msra.mxu0 0
    %963 = vmatprep.subr.bf16.mxu0 0
    %964 = vmatpush1.bf16.msra.mxu0 0
    %965 = vmatprep.subr.bf16.mxu0 0
    %966 = vmatpush1.bf16.msra.mxu0 0
    %967 = vmatprep.subr.bf16.mxu0 0
    %968 = vmatpush1.bf16.msra.mxu0 0
    %969 = vmatprep.subr.bf16.mxu0 0
    %970 = vmatpush1.bf16.msra.mxu0 0
    %971 = vmatprep.subr.bf16.mxu0 0
    %972 = vmatpush1.bf16.msra.mxu0 0
    %973 = vmatprep.subr.bf16.mxu0 0
    %974 = vmatpush1.bf16.msra.mxu0 0
    %975 = vmatprep.subr.bf16.mxu0 0
    %976 = vmatpush1.bf16.msra.mxu0 0
    %977 = vmatprep.subr.bf16.mxu0 0
    %978 = vmatpush1.bf16.msra.mxu0 0
    %979 = vmatprep.subr.bf16.mxu0 0
    %980 = vmatpush1.bf16.msra.mxu0 0
    %981 = vmatprep.subr.bf16.mxu0 0
    %982 = vmatpush1.bf16.msra.mxu0 0
    %983 = vmatprep.subr.bf16.mxu0 0
    %984 = vmatpush1.bf16.msra.mxu0 0
    %985 = vmatprep.mubr.bf16.mxu0 0
    %986 = vmatmul.mubr.bf16.gmra.mrb[0].mxu0 %v951
    %v987 = vpop.f32.mrb[0].mxu0
    %v988 = vadd.f32 0.0, %v987
    %v989 = vpop.f32.mrb[0].mxu0
    %v990 = vpop.f32.mrb[0].mxu0
    %v991 = vadd.f32 0.0, %v990
    %v992 = vpop.f32.mrb[0].mxu0
    %993 = vdwg.mxu0
    %v994 = vadd.f32 %v792, %v988
    %v995 = vadd.f32 %v793, %v991
    %v996 = vlaneseq
    %v997 = vshrl.u32 %v996, 7
    %v998 = vsub.s32 0, %v997
    %v999 = vrot.slane %v99, %v998
    %v1000 = vadd.f32 %v994, %v999
    %v1001 = vadd.f32 %v995, %v999
    %s1002 = scalar_lea.vmem %s6, 8
    %v1003 = vld [vmem:[%s1002] sm:$0x1]
    %v1004 = vld [vmem:[%s1002 + $0x1] sm:$0x1]
    %v1005 = vld [vmem:[%s1002 + $0x2] sm:$0x1]
    %v1006 = vld [vmem:[%s1002 + $0x3] sm:$0x1]
    %v1007 = vld [vmem:[%s1002 + $0x4] sm:$0x1]
    %v1008 = vld [vmem:[%s1002 + $0x5] sm:$0x1]
    %v1009 = vsel %vm100, %v1000, 0.0
    %1010 = vadd.xlane.f32.xlu0 %v1009
    %v1011 = vpop.xlane.xlu0 %1010
    %v1012 = vsel %vm100, %v1001, 0.0
    %1013 = vadd.xlane.f32.xlu0 %v1012
    %v1014 = vpop.xlane.xlu0 %1013
    %v1015 = vmul.f32 %v1011, %v107
    %v1016 = vmul.f32 %v1014, %v107
    %v1017 = vsub.f32 %v1000, %v1015
    %v1018 = vsub.f32 %v1001, %v1016
    %v1019 = vmul.f32 %v1017, %v1017
    %v1020 = vmul.f32 %v1018, %v1018
    %v1021 = vsel %vm100, %v1019, 0.0
    %1022 = vadd.xlane.f32.xlu0 %v1021
    %v1023 = vpop.xlane.xlu0 %1022
    %v1024 = vsel %vm100, %v1020, 0.0
    %1025 = vadd.xlane.f32.xlu0 %v1024
    %v1026 = vpop.xlane.xlu0 %1025
    %v1027 = vmul.f32 %v1023, %v107
    %v1028 = vmul.f32 %v1026, %v107
    %v1029 = vadd.f32 %v1027, 1e-05
    %v1030 = vadd.f32 %v1028, 1e-05
    %v1031 = vrsqrt.pop %v1029
    %v1032 = vrsqrt.pop %v1030
    %v1033 = vmul.f32 %v1017, %v1031
    %v1034 = vmul.f32 %v1018, %v1032
    %v1035 = vlaneseq
    %v1036 = vshrl.u32 %v1035, 7
    %v1037 = vsub.s32 0, %v1036
    %v1038 = vrot.slane %v1003, %v1037
    %v1039 = vmul.f32 %v1033, %v1038
    %v1040 = vmul.f32 %v1034, %v1038
    %v1041 = vlaneseq
    %v1042 = vshrl.u32 %v1041, 7
    %v1043 = vsub.s32 0, %v1042
    %v1044 = vrot.slane %v1004, %v1043
    %v1045 = vadd.f32 %v1039, %v1044
    %v1046 = vadd.f32 %v1040, %v1044
    %v1047 = vpack.c.bf16 %v1046, %v1045
    %s1048 = scalar_lea.vmem %s3, 16
    %v1049 = vld [vmem:[%s1048] sm:$0xf]
    %v1050 = vld [vmem:[%s1048 + $0x4] sm:$0xf]
    %v1051 = vld [vmem:[%s1048 + $0x8] sm:$0xf]
    %v1052 = vld [vmem:[%s1048 + $0xc] sm:$0xf]
    %s1053 = scalar_lea.vmem %s4, 1
    %v1054 = vld [vmem:[%s1053] sm:$0x1]
    %v1056 = vlaneseq
    %v1057 = vshrl.u32 %v1056, 7
    %v1058 = vsub.s32 0, %v1057
    %v1059 = vrot.slane %v1054, %v1058
    %v1065 = vunpack.c.l.b16 %v1049
    %v1066 = vunpack.c.l.b16 %v1050
    %v1067 = vunpack.c.l.b16 %v1051
    %v1068 = vunpack.c.l.b16 %v1052
    %v1069 = vpack.c.b16 %v1066, %v1065
    %v1070 = vpack.c.b16 %v1068, %v1067
    %v1074 = vsel %vm100, %v1047, 0
    %1076 = vmatprep.subr.bf16.mxu0 0
    %1077 = vmatpush1.bf16.msra.mxu0 %v1069
    %1078 = vmatprep.subr.bf16.mxu0 0
    %1079 = vmatpush1.bf16.msra.mxu0 %v1070
    %1080 = vmatprep.subr.bf16.mxu0 0
    %1081 = vmatpush1.bf16.msra.mxu0 0
    %1082 = vmatprep.subr.bf16.mxu0 0
    %1083 = vmatpush1.bf16.msra.mxu0 0
    %1084 = vmatprep.subr.bf16.mxu0 0
    %1085 = vmatpush1.bf16.msra.mxu0 0
    %1086 = vmatprep.subr.bf16.mxu0 0
    %1087 = vmatpush1.bf16.msra.mxu0 0
    %1088 = vmatprep.subr.bf16.mxu0 0
    %1089 = vmatpush1.bf16.msra.mxu0 0
    %1090 = vmatprep.subr.bf16.mxu0 0
    %1091 = vmatpush1.bf16.msra.mxu0 0
    %1092 = vmatprep.subr.bf16.mxu0 0
    %1093 = vmatpush1.bf16.msra.mxu0 0
    %1094 = vmatprep.subr.bf16.mxu0 0
    %1095 = vmatpush1.bf16.msra.mxu0 0
    %1096 = vmatprep.subr.bf16.mxu0 0
    %1097 = vmatpush1.bf16.msra.mxu0 0
    %1098 = vmatprep.subr.bf16.mxu0 0
    %1099 = vmatpush1.bf16.msra.mxu0 0
    %1100 = vmatprep.subr.bf16.mxu0 0
    %1101 = vmatpush1.bf16.msra.mxu0 0
    %1102 = vmatprep.subr.bf16.mxu0 0
    %1103 = vmatpush1.bf16.msra.mxu0 0
    %1104 = vmatprep.subr.bf16.mxu0 0
    %1105 = vmatpush1.bf16.msra.mxu0 0
    %1106 = vmatprep.subr.bf16.mxu0 0
    %1107 = vmatpush1.bf16.msra.mxu0 0
    %1108 = vmatprep.mubr.bf16.mxu0 0
    %1109 = vmatmul.mubr.bf16.gmra.mrb[0].mxu0 %v1074
    %v1110 = vpop.f32.mrb[0].mxu0
    %v1111 = vadd.f32 %v1059, %v1110
    %v1112 = vpop.f32.mrb[0].mxu0
    %v1113 = vpop.f32.mrb[0].mxu0
    %v1114 = vadd.f32 %v1059, %v1113
    %v1115 = vpop.f32.mrb[0].mxu0
    %1116 = vdwg.mxu0
    %v1117 = vpack.c.bf16 %v1114, %v1111
    %1119 = vrot.lane.b32.xlu0 %v1117, 96
    %v1120 = vpop.permute.xlu0 %1119
    %v1122 = vsel %vm212, %v1117, 0
    %v1125 = vsel %vm212, %v1120, 0
    %1127 = vmatprep.subr.bf16.mxu0 0
    %1128 = vmatpush1.bf16.xpose.msra.mxu0 %v1125
    %1129 = vmatprep.subr.bf16.mxu0 0
    %1130 = vmatpush1.bf16.xpose.msra.mxu0 0
    %1131 = vmatprep.subr.bf16.mxu0 0
    %1132 = vmatpush1.bf16.xpose.msra.mxu0 0
    %1133 = vmatprep.subr.bf16.mxu0 0
    %1134 = vmatpush1.bf16.xpose.msra.mxu0 0
    %1135 = vmatprep.subr.bf16.mxu0 0
    %1136 = vmatpush1.bf16.xpose.msra.mxu0 0
    %1137 = vmatprep.subr.bf16.mxu0 0
    %1138 = vmatpush1.bf16.xpose.msra.mxu0 0
    %1139 = vmatprep.subr.bf16.mxu0 0
    %1140 = vmatpush1.bf16.xpose.msra.mxu0 0
    %1141 = vmatprep.subr.bf16.mxu0 0
    %1142 = vmatpush1.bf16.xpose.msra.mxu0 0
    %1143 = vmatprep.subr.bf16.mxu0 0
    %1144 = vmatpush1.bf16.xpose.msra.mxu0 0
    %1145 = vmatprep.subr.bf16.mxu0 0
    %1146 = vmatpush1.bf16.xpose.msra.mxu0 0
    %1147 = vmatprep.subr.bf16.mxu0 0
    %1148 = vmatpush1.bf16.xpose.msra.mxu0 0
    %1149 = vmatprep.subr.bf16.mxu0 0
    %1150 = vmatpush1.bf16.xpose.msra.mxu0 0
    %1151 = vmatprep.subr.bf16.mxu0 0
    %1152 = vmatpush1.bf16.xpose.msra.mxu0 0
    %1153 = vmatprep.subr.bf16.mxu0 0
    %1154 = vmatpush1.bf16.xpose.msra.mxu0 0
    %1155 = vmatprep.subr.bf16.mxu0 0
    %1156 = vmatpush1.bf16.xpose.msra.mxu0 0
    %1157 = vmatprep.subr.bf16.mxu0 0
    %1158 = vmatpush1.bf16.xpose.msra.mxu0 0
    %1159 = vmatprep.mubr.bf16.mxu0 0
    %1160 = vmatmul.mubr.bf16.gmra.mrb[0].mxu0 %v1122
    %v1161 = vpop.f32.mrb[0].mxu0
    %v1162 = vadd.f32 %v92, %v1161
    %v1163 = vpop.f32.mrb[0].mxu0
    %v1164 = vpop.f32.mrb[0].mxu0
    %v1165 = vadd.f32 %v93, %v1164
    %v1166 = vpop.f32.mrb[0].mxu0
    %1167 = vdwg.mxu0
    %v1168 = vsel %vm260, %v1162, -inf
    %1169 = vmax.xlane.f32.xlu0 %v1168
    %v1170 = vpop.xlane.xlu0 %1169
    %v1171 = vsel %vm260, %v1165, -inf
    %1172 = vmax.xlane.f32.xlu0 %v1171
    %v1173 = vpop.xlane.xlu0 %1172
    %v1174 = vsub.f32 %v1162, %v1170
    %v1175 = vsub.f32 %v1165, %v1173
    %v1176 = vmul.f32 %v1174, 1.442695
    %v1177 = vpow.pop %v1176
    %v1178 = vmul.f32 %v1175, 1.442695
    %v1179 = vpow.pop %v1178
    %v1180 = vsel %vm260, %v1177, 0.0
    %1181 = vadd.xlane.f32.xlu0 %v1180
    %v1182 = vpop.xlane.xlu0 %1181
    %v1183 = vsel %vm260, %v1179, 0.0
    %1184 = vadd.xlane.f32.xlu0 %v1183
    %v1185 = vpop.xlane.xlu0 %1184
    %v1186 = vrcp.pop %v1182
    %v1187 = vrcp.pop %v1185
    %v1188 = vmul.f32 %v1177, %v1186
    %v1189 = vmul.f32 %v1179, %v1187
    %v1190 = vpack.c.bf16 %v1189, %v1188
    %1191 = vrot.lane.b32.xlu0 %v1117, 64
    %v1192 = vpop.permute.xlu0 %1191
    %v1195 = vsel %vm260, %v1190, 0
    %1197 = vmatprep.subr.bf16.mxu0 0
    %1198 = vmatpush1.bf16.msra.mxu0 %v1192
    %1199 = vmatprep.subr.bf16.mxu0 0
    %1200 = vmatpush1.bf16.msra.mxu0 0
    %1201 = vmatprep.subr.bf16.mxu0 0
    %1202 = vmatpush1.bf16.msra.mxu0 0
    %1203 = vmatprep.subr.bf16.mxu0 0
    %1204 = vmatpush1.bf16.msra.mxu0 0
    %1205 = vmatprep.subr.bf16.mxu0 0
    %1206 = vmatpush1.bf16.msra.mxu0 0
    %1207 = vmatprep.subr.bf16.mxu0 0
    %1208 = vmatpush1.bf16.msra.mxu0 0
    %1209 = vmatprep.subr.bf16.mxu0 0
    %1210 = vmatpush1.bf16.msra.mxu0 0
    %1211 = vmatprep.subr.bf16.mxu0 0
    %1212 = vmatpush1.bf16.msra.mxu0 0
    %1213 = vmatprep.subr.bf16.mxu0 0
    %1214 = vmatpush1.bf16.msra.mxu0 0
    %1215 = vmatprep.subr.bf16.mxu0 0
    %1216 = vmatpush1.bf16.msra.mxu0 0
    %1217 = vmatprep.subr.bf16.mxu0 0
    %1218 = vmatpush1.bf16.msra.mxu0 0
    %1219 = vmatprep.subr.bf16.mxu0 0
    %1220 = vmatpush1.bf16.msra.mxu0 0
    %1221 = vmatprep.subr.bf16.mxu0 0
    %1222 = vmatpush1.bf16.msra.mxu0 0
    %1223 = vmatprep.subr.bf16.mxu0 0
    %1224 = vmatpush1.bf16.msra.mxu0 0
    %1225 = vmatprep.subr.bf16.mxu0 0
    %1226 = vmatpush1.bf16.msra.mxu0 0
    %1227 = vmatprep.subr.bf16.mxu0 0
    %1228 = vmatpush1.bf16.msra.mxu0 0
    %1229 = vmatprep.mubr.bf16.mxu0 0
    %1230 = vmatmul.mubr.bf16.gmra.mrb[0].mxu0 %v1195
    %v1231 = vpop.f32.mrb[0].mxu0
    %v1232 = vadd.f32 0.0, %v1231
    %v1233 = vpop.f32.mrb[0].mxu0
    %v1234 = vpop.f32.mrb[0].mxu0
    %v1235 = vadd.f32 0.0, %v1234
    %v1236 = vpop.f32.mrb[0].mxu0
    %1237 = vdwg.mxu0
    %1238 = vrot.lane.b32.xlu0 %v1117, 120
    %v1239 = vpop.permute.xlu0 %1238
    %1240 = vrot.lane.b32.xlu0 %v1117, 88
    %v1241 = vpop.permute.xlu0 %1240
    %v1243 = vsel %vm212, %v1239, 0
    %v1246 = vsel %vm212, %v1241, 0
    %1248 = vmatprep.subr.bf16.mxu0 0
    %1249 = vmatpush1.bf16.xpose.msra.mxu0 %v1246
    %1250 = vmatprep.subr.bf16.mxu0 0
    %1251 = vmatpush1.bf16.xpose.msra.mxu0 0
    %1252 = vmatprep.subr.bf16.mxu0 0
    %1253 = vmatpush1.bf16.xpose.msra.mxu0 0
    %1254 = vmatprep.subr.bf16.mxu0 0
    %1255 = vmatpush1.bf16.xpose.msra.mxu0 0
    %1256 = vmatprep.subr.bf16.mxu0 0
    %1257 = vmatpush1.bf16.xpose.msra.mxu0 0
    %1258 = vmatprep.subr.bf16.mxu0 0
    %1259 = vmatpush1.bf16.xpose.msra.mxu0 0
    %1260 = vmatprep.subr.bf16.mxu0 0
    %1261 = vmatpush1.bf16.xpose.msra.mxu0 0
    %1262 = vmatprep.subr.bf16.mxu0 0
    %1263 = vmatpush1.bf16.xpose.msra.mxu0 0
    %1264 = vmatprep.subr.bf16.mxu0 0
    %1265 = vmatpush1.bf16.xpose.msra.mxu0 0
    %1266 = vmatprep.subr.bf16.mxu0 0
    %1267 = vmatpush1.bf16.xpose.msra.mxu0 0
    %1268 = vmatprep.subr.bf16.mxu0 0
    %1269 = vmatpush1.bf16.xpose.msra.mxu0 0
    %1270 = vmatprep.subr.bf16.mxu0 0
    %1271 = vmatpush1.bf16.xpose.msra.mxu0 0
    %1272 = vmatprep.subr.bf16.mxu0 0
    %1273 = vmatpush1.bf16.xpose.msra.mxu0 0
    %1274 = vmatprep.subr.bf16.mxu0 0
    %1275 = vmatpush1.bf16.xpose.msra.mxu0 0
    %1276 = vmatprep.subr.bf16.mxu0 0
    %1277 = vmatpush1.bf16.xpose.msra.mxu0 0
    %1278 = vmatprep.subr.bf16.mxu0 0
    %1279 = vmatpush1.bf16.xpose.msra.mxu0 0
    %1280 = vmatprep.mubr.bf16.mxu0 0
    %1281 = vmatmul.mubr.bf16.gmra.mrb[0].mxu0 %v1243
    %v1282 = vpop.f32.mrb[0].mxu0
    %v1283 = vadd.f32 %v92, %v1282
    %v1284 = vpop.f32.mrb[0].mxu0
    %v1285 = vpop.f32.mrb[0].mxu0
    %v1286 = vadd.f32 %v93, %v1285
    %v1287 = vpop.f32.mrb[0].mxu0
    %1288 = vdwg.mxu0
    %v1289 = vsel %vm260, %v1283, -inf
    %1290 = vmax.xlane.f32.xlu0 %v1289
    %v1291 = vpop.xlane.xlu0 %1290
    %v1292 = vsel %vm260, %v1286, -inf
    %1293 = vmax.xlane.f32.xlu0 %v1292
    %v1294 = vpop.xlane.xlu0 %1293
    %v1295 = vsub.f32 %v1283, %v1291
    %v1296 = vsub.f32 %v1286, %v1294
    %v1297 = vmul.f32 %v1295, 1.442695
    %v1298 = vpow.pop %v1297
    %v1299 = vmul.f32 %v1296, 1.442695
    %v1300 = vpow.pop %v1299
    %v1301 = vsel %vm260, %v1298, 0.0
    %1302 = vadd.xlane.f32.xlu0 %v1301
    %v1303 = vpop.xlane.xlu0 %1302
    %v1304 = vsel %vm260, %v1300, 0.0
    %1305 = vadd.xlane.f32.xlu0 %v1304
    %v1306 = vpop.xlane.xlu0 %1305
    %v1307 = vrcp.pop %v1303
    %v1308 = vrcp.pop %v1306
    %v1309 = vmul.f32 %v1298, %v1307
    %v1310 = vmul.f32 %v1300, %v1308
    %v1311 = vpack.c.bf16 %v1310, %v1309
    %1312 = vrot.lane.b32.xlu0 %v1117, 56
    %v1313 = vpop.permute.xlu0 %1312
    %v1316 = vsel %vm260, %v1311, 0
    %1318 = vmatprep.subr.bf16.mxu0 0
    %1319 = vmatpush1.bf16.msra.mxu0 %v1313
    %1320 = vmatprep.subr.bf16.mxu0 0
    %1321 = vmatpush1.bf16.msra.mxu0 0
    %1322 = vmatprep.subr.bf16.mxu0 0
    %1323 = vmatpush1.bf16.msra.mxu0 0
    %1324 = vmatprep.subr.bf16.mxu0 0
    %1325 = vmatpush1.bf16.msra.mxu0 0
    %1326 = vmatprep.subr.bf16.mxu0 0
    %1327 = vmatpush1.bf16.msra.mxu0 0
    %1328 = vmatprep.subr.bf16.mxu0 0
    %1329 = vmatpush1.bf16.msra.mxu0 0
    %1330 = vmatprep.subr.bf16.mxu0 0
    %1331 = vmatpush1.bf16.msra.mxu0 0
    %1332 = vmatprep.subr.bf16.mxu0 0
    %1333 = vmatpush1.bf16.msra.mxu0 0
    %1334 = vmatprep.subr.bf16.mxu0 0
    %1335 = vmatpush1.bf16.msra.mxu0 0
    %1336 = vmatprep.subr.bf16.mxu0 0
    %1337 = vmatpush1.bf16.msra.mxu0 0
    %1338 = vmatprep.subr.bf16.mxu0 0
    %1339 = vmatpush1.bf16.msra.mxu0 0
    %1340 = vmatprep.subr.bf16.mxu0 0
    %1341 = vmatpush1.bf16.msra.mxu0 0
    %1342 = vmatprep.subr.bf16.mxu0 0
    %1343 = vmatpush1.bf16.msra.mxu0 0
    %1344 = vmatprep.subr.bf16.mxu0 0
    %1345 = vmatpush1.bf16.msra.mxu0 0
    %1346 = vmatprep.subr.bf16.mxu0 0
    %1347 = vmatpush1.bf16.msra.mxu0 0
    %1348 = vmatprep.subr.bf16.mxu0 0
    %1349 = vmatpush1.bf16.msra.mxu0 0
    %1350 = vmatprep.mubr.bf16.mxu0 0
    %1351 = vmatmul.mubr.bf16.gmra.mrb[0].mxu0 %v1316
    %v1352 = vpop.f32.mrb[0].mxu0
    %v1353 = vadd.f32 0.0, %v1352
    %v1354 = vpop.f32.mrb[0].mxu0
    %v1355 = vpop.f32.mrb[0].mxu0
    %v1356 = vadd.f32 0.0, %v1355
    %v1357 = vpop.f32.mrb[0].mxu0
    %1358 = vdwg.mxu0
    %1359 = vrot.lane.b32.xlu0 %v1117, 112
    %v1360 = vpop.permute.xlu0 %1359
    %1361 = vrot.lane.b32.xlu0 %v1117, 80
    %v1362 = vpop.permute.xlu0 %1361
    %v1364 = vsel %vm212, %v1360, 0
    %v1367 = vsel %vm212, %v1362, 0
    %1369 = vmatprep.subr.bf16.mxu0 0
    %1370 = vmatpush1.bf16.xpose.msra.mxu0 %v1367
    %1371 = vmatprep.subr.bf16.mxu0 0
    %1372 = vmatpush1.bf16.xpose.msra.mxu0 0
    %1373 = vmatprep.subr.bf16.mxu0 0
    %1374 = vmatpush1.bf16.xpose.msra.mxu0 0
    %1375 = vmatprep.subr.bf16.mxu0 0
    %1376 = vmatpush1.bf16.xpose.msra.mxu0 0
    %1377 = vmatprep.subr.bf16.mxu0 0
    %1378 = vmatpush1.bf16.xpose.msra.mxu0 0
    %1379 = vmatprep.subr.bf16.mxu0 0
    %1380 = vmatpush1.bf16.xpose.msra.mxu0 0
    %1381 = vmatprep.subr.bf16.mxu0 0
    %1382 = vmatpush1.bf16.xpose.msra.mxu0 0
    %1383 = vmatprep.subr.bf16.mxu0 0
    %1384 = vmatpush1.bf16.xpose.msra.mxu0 0
    %1385 = vmatprep.subr.bf16.mxu0 0
    %1386 = vmatpush1.bf16.xpose.msra.mxu0 0
    %1387 = vmatprep.subr.bf16.mxu0 0
    %1388 = vmatpush1.bf16.xpose.msra.mxu0 0
    %1389 = vmatprep.subr.bf16.mxu0 0
    %1390 = vmatpush1.bf16.xpose.msra.mxu0 0
    %1391 = vmatprep.subr.bf16.mxu0 0
    %1392 = vmatpush1.bf16.xpose.msra.mxu0 0
    %1393 = vmatprep.subr.bf16.mxu0 0
    %1394 = vmatpush1.bf16.xpose.msra.mxu0 0
    %1395 = vmatprep.subr.bf16.mxu0 0
    %1396 = vmatpush1.bf16.xpose.msra.mxu0 0
    %1397 = vmatprep.subr.bf16.mxu0 0
    %1398 = vmatpush1.bf16.xpose.msra.mxu0 0
    %1399 = vmatprep.subr.bf16.mxu0 0
    %1400 = vmatpush1.bf16.xpose.msra.mxu0 0
    %1401 = vmatprep.mubr.bf16.mxu0 0
    %1402 = vmatmul.mubr.bf16.gmra.mrb[0].mxu0 %v1364
    %v1403 = vpop.f32.mrb[0].mxu0
    %v1404 = vadd.f32 %v92, %v1403
    %v1405 = vpop.f32.mrb[0].mxu0
    %v1406 = vpop.f32.mrb[0].mxu0
    %v1407 = vadd.f32 %v93, %v1406
    %v1408 = vpop.f32.mrb[0].mxu0
    %1409 = vdwg.mxu0
    %v1410 = vsel %vm260, %v1404, -inf
    %1411 = vmax.xlane.f32.xlu0 %v1410
    %v1412 = vpop.xlane.xlu0 %1411
    %v1413 = vsel %vm260, %v1407, -inf
    %1414 = vmax.xlane.f32.xlu0 %v1413
    %v1415 = vpop.xlane.xlu0 %1414
    %v1416 = vsub.f32 %v1404, %v1412
    %v1417 = vsub.f32 %v1407, %v1415
    %v1418 = vmul.f32 %v1416, 1.442695
    %v1419 = vpow.pop %v1418
    %v1420 = vmul.f32 %v1417, 1.442695
    %v1421 = vpow.pop %v1420
    %v1422 = vsel %vm260, %v1419, 0.0
    %1423 = vadd.xlane.f32.xlu0 %v1422
    %v1424 = vpop.xlane.xlu0 %1423
    %v1425 = vsel %vm260, %v1421, 0.0
    %1426 = vadd.xlane.f32.xlu0 %v1425
    %v1427 = vpop.xlane.xlu0 %1426
    %v1428 = vrcp.pop %v1424
    %v1429 = vrcp.pop %v1427
    %v1430 = vmul.f32 %v1419, %v1428
    %v1431 = vmul.f32 %v1421, %v1429
    %v1432 = vpack.c.bf16 %v1431, %v1430
    %1433 = vrot.lane.b32.xlu0 %v1117, 48
    %v1434 = vpop.permute.xlu0 %1433
    %v1437 = vsel %vm260, %v1432, 0
    %1439 = vmatprep.subr.bf16.mxu0 0
    %1440 = vmatpush1.bf16.msra.mxu0 %v1434
    %1441 = vmatprep.subr.bf16.mxu0 0
    %1442 = vmatpush1.bf16.msra.mxu0 0
    %1443 = vmatprep.subr.bf16.mxu0 0
    %1444 = vmatpush1.bf16.msra.mxu0 0
    %1445 = vmatprep.subr.bf16.mxu0 0
    %1446 = vmatpush1.bf16.msra.mxu0 0
    %1447 = vmatprep.subr.bf16.mxu0 0
    %1448 = vmatpush1.bf16.msra.mxu0 0
    %1449 = vmatprep.subr.bf16.mxu0 0
    %1450 = vmatpush1.bf16.msra.mxu0 0
    %1451 = vmatprep.subr.bf16.mxu0 0
    %1452 = vmatpush1.bf16.msra.mxu0 0
    %1453 = vmatprep.subr.bf16.mxu0 0
    %1454 = vmatpush1.bf16.msra.mxu0 0
    %1455 = vmatprep.subr.bf16.mxu0 0
    %1456 = vmatpush1.bf16.msra.mxu0 0
    %1457 = vmatprep.subr.bf16.mxu0 0
    %1458 = vmatpush1.bf16.msra.mxu0 0
    %1459 = vmatprep.subr.bf16.mxu0 0
    %1460 = vmatpush1.bf16.msra.mxu0 0
    %1461 = vmatprep.subr.bf16.mxu0 0
    %1462 = vmatpush1.bf16.msra.mxu0 0
    %1463 = vmatprep.subr.bf16.mxu0 0
    %1464 = vmatpush1.bf16.msra.mxu0 0
    %1465 = vmatprep.subr.bf16.mxu0 0
    %1466 = vmatpush1.bf16.msra.mxu0 0
    %1467 = vmatprep.subr.bf16.mxu0 0
    %1468 = vmatpush1.bf16.msra.mxu0 0
    %1469 = vmatprep.subr.bf16.mxu0 0
    %1470 = vmatpush1.bf16.msra.mxu0 0
    %1471 = vmatprep.mubr.bf16.mxu0 0
    %1472 = vmatmul.mubr.bf16.gmra.mrb[0].mxu0 %v1437
    %v1473 = vpop.f32.mrb[0].mxu0
    %v1474 = vadd.f32 0.0, %v1473
    %v1475 = vpop.f32.mrb[0].mxu0
    %v1476 = vpop.f32.mrb[0].mxu0
    %v1477 = vadd.f32 0.0, %v1476
    %v1478 = vpop.f32.mrb[0].mxu0
    %1479 = vdwg.mxu0
    %1480 = vrot.lane.b32.xlu0 %v1117, 104
    %v1481 = vpop.permute.xlu0 %1480
    %1482 = vrot.lane.b32.xlu0 %v1117, 72
    %v1483 = vpop.permute.xlu0 %1482
    %v1485 = vsel %vm212, %v1481, 0
    %v1488 = vsel %vm212, %v1483, 0
    %1490 = vmatprep.subr.bf16.mxu0 0
    %1491 = vmatpush1.bf16.xpose.msra.mxu0 %v1488
    %1492 = vmatprep.subr.bf16.mxu0 0
    %1493 = vmatpush1.bf16.xpose.msra.mxu0 0
    %1494 = vmatprep.subr.bf16.mxu0 0
    %1495 = vmatpush1.bf16.xpose.msra.mxu0 0
    %1496 = vmatprep.subr.bf16.mxu0 0
    %1497 = vmatpush1.bf16.xpose.msra.mxu0 0
    %1498 = vmatprep.subr.bf16.mxu0 0
    %1499 = vmatpush1.bf16.xpose.msra.mxu0 0
    %1500 = vmatprep.subr.bf16.mxu0 0
    %1501 = vmatpush1.bf16.xpose.msra.mxu0 0
    %1502 = vmatprep.subr.bf16.mxu0 0
    %1503 = vmatpush1.bf16.xpose.msra.mxu0 0
    %1504 = vmatprep.subr.bf16.mxu0 0
    %1505 = vmatpush1.bf16.xpose.msra.mxu0 0
    %1506 = vmatprep.subr.bf16.mxu0 0
    %1507 = vmatpush1.bf16.xpose.msra.mxu0 0
    %1508 = vmatprep.subr.bf16.mxu0 0
    %1509 = vmatpush1.bf16.xpose.msra.mxu0 0
    %1510 = vmatprep.subr.bf16.mxu0 0
    %1511 = vmatpush1.bf16.xpose.msra.mxu0 0
    %1512 = vmatprep.subr.bf16.mxu0 0
    %1513 = vmatpush1.bf16.xpose.msra.mxu0 0
    %1514 = vmatprep.subr.bf16.mxu0 0
    %1515 = vmatpush1.bf16.xpose.msra.mxu0 0
    %1516 = vmatprep.subr.bf16.mxu0 0
    %1517 = vmatpush1.bf16.xpose.msra.mxu0 0
    %1518 = vmatprep.subr.bf16.mxu0 0
    %1519 = vmatpush1.bf16.xpose.msra.mxu0 0
    %1520 = vmatprep.subr.bf16.mxu0 0
    %1521 = vmatpush1.bf16.xpose.msra.mxu0 0
    %1522 = vmatprep.mubr.bf16.mxu0 0
    %1523 = vmatmul.mubr.bf16.gmra.mrb[0].mxu0 %v1485
    %v1524 = vpop.f32.mrb[0].mxu0
    %v1525 = vadd.f32 %v92, %v1524
    %v1526 = vpop.f32.mrb[0].mxu0
    %v1527 = vpop.f32.mrb[0].mxu0
    %v1528 = vadd.f32 %v93, %v1527
    %v1529 = vpop.f32.mrb[0].mxu0
    %1530 = vdwg.mxu0
    %v1531 = vsel %vm260, %v1525, -inf
    %1532 = vmax.xlane.f32.xlu0 %v1531
    %v1533 = vpop.xlane.xlu0 %1532
    %v1534 = vsel %vm260, %v1528, -inf
    %1535 = vmax.xlane.f32.xlu0 %v1534
    %v1536 = vpop.xlane.xlu0 %1535
    %v1537 = vsub.f32 %v1525, %v1533
    %v1538 = vsub.f32 %v1528, %v1536
    %v1539 = vmul.f32 %v1537, 1.442695
    %v1540 = vpow.pop %v1539
    %v1541 = vmul.f32 %v1538, 1.442695
    %v1542 = vpow.pop %v1541
    %v1543 = vsel %vm260, %v1540, 0.0
    %1544 = vadd.xlane.f32.xlu0 %v1543
    %v1545 = vpop.xlane.xlu0 %1544
    %v1546 = vsel %vm260, %v1542, 0.0
    %1547 = vadd.xlane.f32.xlu0 %v1546
    %v1548 = vpop.xlane.xlu0 %1547
    %v1549 = vrcp.pop %v1545
    %v1550 = vrcp.pop %v1548
    %v1551 = vmul.f32 %v1540, %v1549
    %v1552 = vmul.f32 %v1542, %v1550
    %v1553 = vpack.c.bf16 %v1552, %v1551
    %1554 = vrot.lane.b32.xlu0 %v1117, 40
    %v1555 = vpop.permute.xlu0 %1554
    %v1558 = vsel %vm260, %v1553, 0
    %1560 = vmatprep.subr.bf16.mxu0 0
    %1561 = vmatpush1.bf16.msra.mxu0 %v1555
    %1562 = vmatprep.subr.bf16.mxu0 0
    %1563 = vmatpush1.bf16.msra.mxu0 0
    %1564 = vmatprep.subr.bf16.mxu0 0
    %1565 = vmatpush1.bf16.msra.mxu0 0
    %1566 = vmatprep.subr.bf16.mxu0 0
    %1567 = vmatpush1.bf16.msra.mxu0 0
    %1568 = vmatprep.subr.bf16.mxu0 0
    %1569 = vmatpush1.bf16.msra.mxu0 0
    %1570 = vmatprep.subr.bf16.mxu0 0
    %1571 = vmatpush1.bf16.msra.mxu0 0
    %1572 = vmatprep.subr.bf16.mxu0 0
    %1573 = vmatpush1.bf16.msra.mxu0 0
    %1574 = vmatprep.subr.bf16.mxu0 0
    %1575 = vmatpush1.bf16.msra.mxu0 0
    %1576 = vmatprep.subr.bf16.mxu0 0
    %1577 = vmatpush1.bf16.msra.mxu0 0
    %1578 = vmatprep.subr.bf16.mxu0 0
    %1579 = vmatpush1.bf16.msra.mxu0 0
    %1580 = vmatprep.subr.bf16.mxu0 0
    %1581 = vmatpush1.bf16.msra.mxu0 0
    %1582 = vmatprep.subr.bf16.mxu0 0
    %1583 = vmatpush1.bf16.msra.mxu0 0
    %1584 = vmatprep.subr.bf16.mxu0 0
    %1585 = vmatpush1.bf16.msra.mxu0 0
    %1586 = vmatprep.subr.bf16.mxu0 0
    %1587 = vmatpush1.bf16.msra.mxu0 0
    %1588 = vmatprep.subr.bf16.mxu0 0
    %1589 = vmatpush1.bf16.msra.mxu0 0
    %1590 = vmatprep.subr.bf16.mxu0 0
    %1591 = vmatpush1.bf16.msra.mxu0 0
    %1592 = vmatprep.mubr.bf16.mxu0 0
    %1593 = vmatmul.mubr.bf16.gmra.mrb[0].mxu0 %v1558
    %v1594 = vpop.f32.mrb[0].mxu0
    %v1595 = vadd.f32 0.0, %v1594
    %v1596 = vpop.f32.mrb[0].mxu0
    %v1597 = vpop.f32.mrb[0].mxu0
    %v1598 = vadd.f32 0.0, %v1597
    %v1599 = vpop.f32.mrb[0].mxu0
    %1600 = vdwg.mxu0
    %1603 = vrot.lane.b32.xlu0 %v1353, 8
    %v1604 = vpop.permute.xlu0 %1603
    %1605 = vrot.lane.b32.xlu0 %v1356, 8
    %v1606 = vpop.permute.xlu0 %1605
    %1611 = vrot.lane.b32.xlu0 %v1474, 16
    %v1612 = vpop.permute.xlu0 %1611
    %1613 = vrot.lane.b32.xlu0 %v1477, 16
    %v1614 = vpop.permute.xlu0 %1613
    %1619 = vrot.lane.b32.xlu0 %v1595, 24
    %v1620 = vpop.permute.xlu0 %1619
    %1621 = vrot.lane.b32.xlu0 %v1598, 24
    %v1622 = vpop.permute.xlu0 %1621
    %v1625 = vsel %vm212, %v1232, %v1604
    %v1626 = vsel %vm212, %v1235, %v1606
    %v1627 = vsel %vm260, %v1625, %v1612
    %v1628 = vsel %vm260, %v1626, %v1614
    %v1629 = vsel %vm722, %v1627, %v1620
    %v1630 = vsel %vm722, %v1628, %v1622
    %v1631 = vpack.c.bf16 %v1630, %v1629
    %s1632 = scalar_lea.vmem %s5, 16
    %v1633 = vld [vmem:[%s1632] sm:$0xf]
    %v1634 = vld [vmem:[%s1632 + $0x4] sm:$0xf]
    %v1635 = vld [vmem:[%s1632 + $0x8] sm:$0xf]
    %v1636 = vld [vmem:[%s1632 + $0xc] sm:$0xf]
    %v1641 = vunpack.c.l.b16 %v1633
    %v1642 = vunpack.c.l.b16 %v1634
    %v1643 = vunpack.c.l.b16 %v1635
    %v1644 = vunpack.c.l.b16 %v1636
    %v1645 = vpack.c.b16 %v1642, %v1641
    %v1646 = vpack.c.b16 %v1644, %v1643
    %v1650 = vsel %vm100, %v1631, 0
    %1652 = vmatprep.subr.bf16.mxu0 0
    %1653 = vmatpush1.bf16.msra.mxu0 %v1645
    %1654 = vmatprep.subr.bf16.mxu0 0
    %1655 = vmatpush1.bf16.msra.mxu0 %v1646
    %1656 = vmatprep.subr.bf16.mxu0 0
    %1657 = vmatpush1.bf16.msra.mxu0 0
    %1658 = vmatprep.subr.bf16.mxu0 0
    %1659 = vmatpush1.bf16.msra.mxu0 0
    %1660 = vmatprep.subr.bf16.mxu0 0
    %1661 = vmatpush1.bf16.msra.mxu0 0
    %1662 = vmatprep.subr.bf16.mxu0 0
    %1663 = vmatpush1.bf16.msra.mxu0 0
    %1664 = vmatprep.subr.bf16.mxu0 0
    %1665 = vmatpush1.bf16.msra.mxu0 0
    %1666 = vmatprep.subr.bf16.mxu0 0
    %1667 = vmatpush1.bf16.msra.mxu0 0
    %1668 = vmatprep.subr.bf16.mxu0 0
    %1669 = vmatpush1.bf16.msra.mxu0 0
    %1670 = vmatprep.subr.bf16.mxu0 0
    %1671 = vmatpush1.bf16.msra.mxu0 0
    %1672 = vmatprep.subr.bf16.mxu0 0
    %1673 = vmatpush1.bf16.msra.mxu0 0
    %1674 = vmatprep.subr.bf16.mxu0 0
    %1675 = vmatpush1.bf16.msra.mxu0 0
    %1676 = vmatprep.subr.bf16.mxu0 0
    %1677 = vmatpush1.bf16.msra.mxu0 0
    %1678 = vmatprep.subr.bf16.mxu0 0
    %1679 = vmatpush1.bf16.msra.mxu0 0
    %1680 = vmatprep.subr.bf16.mxu0 0
    %1681 = vmatpush1.bf16.msra.mxu0 0
    %1682 = vmatprep.subr.bf16.mxu0 0
    %1683 = vmatpush1.bf16.msra.mxu0 0
    %1684 = vmatprep.mubr.bf16.mxu0 0
    %1685 = vmatmul.mubr.bf16.gmra.mrb[0].mxu0 %v1650
    %v1686 = vpop.f32.mrb[0].mxu0
    %v1687 = vadd.f32 0.0, %v1686
    %v1688 = vpop.f32.mrb[0].mxu0
    %v1689 = vpop.f32.mrb[0].mxu0
    %v1690 = vadd.f32 0.0, %v1689
    %v1691 = vpop.f32.mrb[0].mxu0
    %1692 = vdwg.mxu0
    %v1693 = vadd.f32 %v1000, %v1687
    %v1694 = vadd.f32 %v1001, %v1690
    %v1695 = vlaneseq
    %v1696 = vshrl.u32 %v1695, 7
    %v1697 = vsub.s32 0, %v1696
    %v1698 = vrot.slane %v1007, %v1697
    %v1699 = vadd.f32 %v1693, %v1698
    %v1700 = vadd.f32 %v1694, %v1698
    %v1701 = vsel %vm100, %v1699, 0.0
    %1702 = vadd.xlane.f32.xlu0 %v1701
    %v1703 = vpop.xlane.xlu0 %1702
    %v1704 = vsel %vm100, %v1700, 0.0
    %1705 = vadd.xlane.f32.xlu0 %v1704
    %v1706 = vpop.xlane.xlu0 %1705
    %v1707 = vmul.f32 %v1703, %v107
    %v1708 = vmul.f32 %v1706, %v107
    %v1709 = vsub.f32 %v1699, %v1707
    %v1710 = vsub.f32 %v1700, %v1708
    %v1711 = vmul.f32 %v1709, %v1709
    %v1712 = vmul.f32 %v1710, %v1710
    %v1713 = vsel %vm100, %v1711, 0.0
    %1714 = vadd.xlane.f32.xlu0 %v1713
    %v1715 = vpop.xlane.xlu0 %1714
    %v1716 = vsel %vm100, %v1712, 0.0
    %1717 = vadd.xlane.f32.xlu0 %v1716
    %v1718 = vpop.xlane.xlu0 %1717
    %v1719 = vmul.f32 %v1715, %v107
    %v1720 = vmul.f32 %v1718, %v107
    %v1721 = vadd.f32 %v1719, 1e-05
    %v1722 = vadd.f32 %v1720, 1e-05
    %v1723 = vrsqrt.pop %v1721
    %v1724 = vrsqrt.pop %v1722
    %v1725 = vmul.f32 %v1709, %v1723
    %v1726 = vmul.f32 %v1710, %v1724
    %v1727 = vlaneseq
    %v1728 = vshrl.u32 %v1727, 7
    %v1729 = vsub.s32 0, %v1728
    %v1730 = vrot.slane %v1005, %v1729
    %v1731 = vmul.f32 %v1725, %v1730
    %v1732 = vmul.f32 %v1726, %v1730
    %v1733 = vlaneseq
    %v1734 = vshrl.u32 %v1733, 7
    %v1735 = vsub.s32 0, %v1734
    %v1736 = vrot.slane %v1006, %v1735
    %v1737 = vadd.f32 %v1731, %v1736
    %v1738 = vadd.f32 %v1732, %v1736
    %v1739 = vpack.c.bf16 %v1738, %v1737
    %s1740 = scalar_lea.vmem %s7, 16
    %v1741 = vld [vmem:[%s1740] sm:$0xf]
    %v1742 = vld [vmem:[%s1740 + $0x4] sm:$0xf]
    %v1743 = vld [vmem:[%s1740 + $0x8] sm:$0xf]
    %v1744 = vld [vmem:[%s1740 + $0xc] sm:$0xf]
    %s1745 = scalar_lea.vmem %s8, 1
    %v1746 = vld [vmem:[%s1745] sm:$0x1]
    %v1748 = vlaneseq
    %v1749 = vshrl.u32 %v1748, 7
    %v1750 = vsub.s32 0, %v1749
    %v1751 = vrot.slane %v1746, %v1750
    %v1757 = vunpack.c.l.b16 %v1741
    %v1758 = vunpack.c.l.b16 %v1742
    %v1759 = vunpack.c.l.b16 %v1743
    %v1760 = vunpack.c.l.b16 %v1744
    %v1761 = vpack.c.b16 %v1758, %v1757
    %v1762 = vpack.c.b16 %v1760, %v1759
    %v1766 = vsel %vm100, %v1739, 0
    %1768 = vmatprep.subr.bf16.mxu0 0
    %1769 = vmatpush1.bf16.msra.mxu0 %v1761
    %1770 = vmatprep.subr.bf16.mxu0 0
    %1771 = vmatpush1.bf16.msra.mxu0 %v1762
    %1772 = vmatprep.subr.bf16.mxu0 0
    %1773 = vmatpush1.bf16.msra.mxu0 0
    %1774 = vmatprep.subr.bf16.mxu0 0
    %1775 = vmatpush1.bf16.msra.mxu0 0
    %1776 = vmatprep.subr.bf16.mxu0 0
    %1777 = vmatpush1.bf16.msra.mxu0 0
    %1778 = vmatprep.subr.bf16.mxu0 0
    %1779 = vmatpush1.bf16.msra.mxu0 0
    %1780 = vmatprep.subr.bf16.mxu0 0
    %1781 = vmatpush1.bf16.msra.mxu0 0
    %1782 = vmatprep.subr.bf16.mxu0 0
    %1783 = vmatpush1.bf16.msra.mxu0 0
    %1784 = vmatprep.subr.bf16.mxu0 0
    %1785 = vmatpush1.bf16.msra.mxu0 0
    %1786 = vmatprep.subr.bf16.mxu0 0
    %1787 = vmatpush1.bf16.msra.mxu0 0
    %1788 = vmatprep.subr.bf16.mxu0 0
    %1789 = vmatpush1.bf16.msra.mxu0 0
    %1790 = vmatprep.subr.bf16.mxu0 0
    %1791 = vmatpush1.bf16.msra.mxu0 0
    %1792 = vmatprep.subr.bf16.mxu0 0
    %1793 = vmatpush1.bf16.msra.mxu0 0
    %1794 = vmatprep.subr.bf16.mxu0 0
    %1795 = vmatpush1.bf16.msra.mxu0 0
    %1796 = vmatprep.subr.bf16.mxu0 0
    %1797 = vmatpush1.bf16.msra.mxu0 0
    %1798 = vmatprep.subr.bf16.mxu0 0
    %1799 = vmatpush1.bf16.msra.mxu0 0
    %1800 = vmatprep.mubr.bf16.mxu0 0
    %1801 = vmatmul.mubr.bf16.gmra.mrb[0].mxu0 %v1766
    %v1802 = vpop.f32.mrb[0].mxu0
    %v1803 = vadd.f32 %v1751, %v1802
    %v1804 = vpop.f32.mrb[0].mxu0
    %v1805 = vpop.f32.mrb[0].mxu0
    %v1806 = vadd.f32 %v1751, %v1805
    %v1807 = vpop.f32.mrb[0].mxu0
    %1808 = vdwg.mxu0
    %v1809 = vmul.f32 %v1803, 1.702
    %v1810 = vmul.f32 %v1806, 1.702
    %v1811 = vxor.u32 %v1809, 2147483648
    %v1812 = vxor.u32 %v1810, 2147483648
    %v1813 = vmul.f32 %v1811, 1.442695
    %v1814 = vpow.pop %v1813
    %v1815 = vmul.f32 %v1812, 1.442695
    %v1816 = vpow.pop %v1815
    %v1817 = vadd.f32 %v1814, 1.0
    %v1818 = vadd.f32 %v1816, 1.0
    %v1819 = vrcp.pop %v1817
    %v1820 = vmul.f32 1.0, %v1819
    %v1821 = vrcp.pop %v1818
    %v1822 = vmul.f32 1.0, %v1821
    %v1823 = vmul.f32 %v1803, %v1820
    %v1824 = vmul.f32 %v1806, %v1822
    %v1825 = vpack.c.bf16 %v1824, %v1823
    %s1826 = scalar_lea.vmem %s9, 32
    %v1827 = vld [vmem:[%s1826] sm:$0xf]
    %v1828 = vld [vmem:[%s1826 + $0x4] sm:$0xf]
    %v1829 = vld [vmem:[%s1826 + $0x8] sm:$0xf]
    %v1830 = vld [vmem:[%s1826 + $0xc] sm:$0xf]
    %v1831 = vld [vmem:[%s1826 + $0x10] sm:$0xf]
    %v1832 = vld [vmem:[%s1826 + $0x14] sm:$0xf]
    %v1833 = vld [vmem:[%s1826 + $0x18] sm:$0xf]
    %v1834 = vld [vmem:[%s1826 + $0x1c] sm:$0xf]
    %v1843 = vunpack.c.l.b16 %v1827
    %v1844 = vunpack.c.l.b16 %v1828
    %v1845 = vunpack.c.l.b16 %v1829
    %v1846 = vunpack.c.l.b16 %v1830
    %v1847 = vunpack.c.l.b16 %v1831
    %v1848 = vunpack.c.l.b16 %v1832
    %v1849 = vunpack.c.l.b16 %v1833
    %v1850 = vunpack.c.l.b16 %v1834
    %v1851 = vpack.c.b16 %v1844, %v1843
    %v1852 = vpack.c.b16 %v1846, %v1845
    %v1853 = vpack.c.b16 %v1848, %v1847
    %v1854 = vpack.c.b16 %v1850, %v1849
    %v1860 = vsel %vm949, %v1825, 0
    %1862 = vmatprep.subr.bf16.mxu0 0
    %1863 = vmatpush1.bf16.msra.mxu0 %v1851
    %1864 = vmatprep.subr.bf16.mxu0 0
    %1865 = vmatpush1.bf16.msra.mxu0 %v1852
    %1866 = vmatprep.subr.bf16.mxu0 0
    %1867 = vmatpush1.bf16.msra.mxu0 %v1853
    %1868 = vmatprep.subr.bf16.mxu0 0
    %1869 = vmatpush1.bf16.msra.mxu0 %v1854
    %1870 = vmatprep.subr.bf16.mxu0 0
    %1871 = vmatpush1.bf16.msra.mxu0 0
    %1872 = vmatprep.subr.bf16.mxu0 0
    %1873 = vmatpush1.bf16.msra.mxu0 0
    %1874 = vmatprep.subr.bf16.mxu0 0
    %1875 = vmatpush1.bf16.msra.mxu0 0
    %1876 = vmatprep.subr.bf16.mxu0 0
    %1877 = vmatpush1.bf16.msra.mxu0 0
    %1878 = vmatprep.subr.bf16.mxu0 0
    %1879 = vmatpush1.bf16.msra.mxu0 0
    %1880 = vmatprep.subr.bf16.mxu0 0
    %1881 = vmatpush1.bf16.msra.mxu0 0
    %1882 = vmatprep.subr.bf16.mxu0 0
    %1883 = vmatpush1.bf16.msra.mxu0 0
    %1884 = vmatprep.subr.bf16.mxu0 0
    %1885 = vmatpush1.bf16.msra.mxu0 0
    %1886 = vmatprep.subr.bf16.mxu0 0
    %1887 = vmatpush1.bf16.msra.mxu0 0
    %1888 = vmatprep.subr.bf16.mxu0 0
    %1889 = vmatpush1.bf16.msra.mxu0 0
    %1890 = vmatprep.subr.bf16.mxu0 0
    %1891 = vmatpush1.bf16.msra.mxu0 0
    %1892 = vmatprep.subr.bf16.mxu0 0
    %1893 = vmatpush1.bf16.msra.mxu0 0
    %1894 = vmatprep.mubr.bf16.mxu0 0
    %1895 = vmatmul.mubr.bf16.gmra.mrb[0].mxu0 %v1860
    %v1896 = vpop.f32.mrb[0].mxu0
    %v1897 = vadd.f32 0.0, %v1896
    %v1898 = vpop.f32.mrb[0].mxu0
    %v1899 = vpop.f32.mrb[0].mxu0
    %v1900 = vadd.f32 0.0, %v1899
    %v1901 = vpop.f32.mrb[0].mxu0
    %1902 = vdwg.mxu0
    %v1903 = vadd.f32 %v1699, %v1897
    %v1904 = vadd.f32 %v1700, %v1900
    %v1905 = vlaneseq
    %v1906 = vshrl.u32 %v1905, 7
    %v1907 = vsub.s32 0, %v1906
    %v1908 = vrot.slane %v1008, %v1907
    %v1909 = vadd.f32 %v1903, %v1908
    %v1910 = vadd.f32 %v1904, %v1908
    %1911 = vst.msk [vmem:[#allocation2] sm:$0xff] %vm100, %v1909
    %1912 = vst.msk [vmem:[#allocation2 + $0x8] sm:$0xff] %vm100, %v1910
    %s1913 = sld [smem:[#allocation4]]
    %s1914 = scalar_lea.vmem [#allocation2], %s1913
    %v1915 = vld [vmem:[%s1914] sm:$0x1]
    %s1916 = sld [smem:[#allocation4 + $0x1]]
    %s1917 = sadd.s32 %s1916, 8
    %s1918 = scalar_lea.vmem [#allocation2], %s1917
    %v1919 = vld [vmem:[%s1918] sm:$0x1]
    %v1921 = vrot.slane %v1919, 7
    %vm1923 = vcmask 1040384
    %v1924 = vsel %vm1923, %v1915, %v1921
    %v1925 = vld [vmem:[%s10] sm:$0x1]
    %v1926 = vld [vmem:[%s10 + $0x1] sm:$0x1]
    %vm1927 = vcmask 254976
    %v1928 = vsel %vm1927, %v1924, 0.0
    %1929 = vadd.xlane.f32.xlu0 %v1928
    %v1930 = vpop.xlane.xlu0 %1929
    %v1931 = vmul.f32 %v1930, %v107
    %v1932 = vsub.f32 %v1924, %v1931
    %v1933 = vmul.f32 %v1932, %v1932
    %v1934 = vsel %vm1927, %v1933, 0.0
    %1935 = vadd.xlane.f32.xlu0 %v1934
    %v1936 = vpop.xlane.xlu0 %1935
    %v1937 = vmul.f32 %v1936, %v107
    %v1938 = vadd.f32 %v1937, 1e-05
    %v1939 = vrsqrt.pop %v1938
    %v1940 = vmul.f32 %v1932, %v1939
    %v1941 = vlaneseq
    %v1942 = vshrl.u32 %v1941, 7
    %v1943 = vsub.s32 0, %v1942
    %v1944 = vrot.slane %v1925, %v1943
    %v1945 = vmul.f32 %v1940, %v1944
    %v1946 = vlaneseq
    %v1947 = vshrl.u32 %v1946, 7
    %v1948 = vsub.s32 0, %v1947
    %v1949 = vrot.slane %v1926, %v1948
    %v1950 = vadd.f32 %v1945, %v1949
    %v1951 = vpack.c.bf16 %v1950, %v1950
    %v1952 = vld [vmem:[%s11] sm:$0xf]
    %v1953 = vld [vmem:[%s11 + $0x4] sm:$0xf]
    %v1954 = vld [vmem:[%s11 + $0x8] sm:$0xf]
    %v1955 = vld [vmem:[%s11 + $0xc] sm:$0xf]
    %v1960 = vunpack.c.l.b16 %v1952
    %v1961 = vunpack.c.l.b16 %v1953
    %v1962 = vunpack.c.l.b16 %v1954
    %v1963 = vunpack.c.l.b16 %v1955
    %v1964 = vpack.c.b16 %v1961, %v1960
    %v1965 = vpack.c.b16 %v1963, %v1962
    %v1969 = vsel %vm100, %v1951, 0
    %1971 = vmatprep.subr.bf16.mxu0 0
    %1972 = vmatpush1.bf16.msra.mxu0 %v1964
    %1973 = vmatprep.subr.bf16.mxu0 0
    %1974 = vmatpush1.bf16.msra.mxu0 %v1965
    %1975 = vmatprep.subr.bf16.mxu0 0
    %1976 = vmatpush1.bf16.msra.mxu0 0
    %1977 = vmatprep.subr.bf16.mxu0 0
    %1978 = vmatpush1.bf16.msra.mxu0 0
    %1979 = vmatprep.subr.bf16.mxu0 0
    %1980 = vmatpush1.bf16.msra.mxu0 0
    %1981 = vmatprep.subr.bf16.mxu0 0
    %1982 = vmatpush1.bf16.msra.mxu0 0
    %1983 = vmatprep.subr.bf16.mxu0 0
    %1984 = vmatpush1.bf16.msra.mxu0 0
    %1985 = vmatprep.subr.bf16.mxu0 0
    %1986 = vmatpush1.bf16.msra.mxu0 0
    %1987 = vmatprep.subr.bf16.mxu0 0
    %1988 = vmatpush1.bf16.msra.mxu0 0
    %1989 = vmatprep.subr.bf16.mxu0 0
    %1990 = vmatpush1.bf16.msra.mxu0 0
    %1991 = vmatprep.subr.bf16.mxu0 0
    %1992 = vmatpush1.bf16.msra.mxu0 0
    %1993 = vmatprep.subr.bf16.mxu0 0
    %1994 = vmatpush1.bf16.msra.mxu0 0
    %1995 = vmatprep.subr.bf16.mxu0 0
    %1996 = vmatpush1.bf16.msra.mxu0 0
    %1997 = vmatprep.subr.bf16.mxu0 0
    %1998 = vmatpush1.bf16.msra.mxu0 0
    %1999 = vmatprep.subr.bf16.mxu0 0
    %2000 = vmatpush1.bf16.msra.mxu0 0
    %2001 = vmatprep.subr.bf16.mxu0 0
    %2002 = vmatpush1.bf16.msra.mxu0 0
    %2003 = vmatprep.mubr.bf16.mxu0 0
    %2004 = vmatmul.mubr.bf16.gmra.mrb[0].mxu0 %v1969
    %v2005 = vpop.f32.mrb[0].mxu0
    %v2006 = vadd.f32 0.0, %v2005
    %v2007 = vpop.f32.mrb[0].mxu0
    %v2008 = vpop.f32.mrb[0].mxu0
    %v2009 = vpop.f32.mrb[0].mxu0
    %2010 = vdwg.mxu0
    %vm2011 = vcmask 123904
    %2012 = vst.msk [vmem:[#allocation5] sm:$0x3] %vm2011, %v2006
    // Predicated region
    $region46: #{clip_get_text_features.1} parent=1 // pred_check
      _
    $region47: #{clip_get_text_features.1} parent=1 // pred_check_branch
      %2014 = sbr.rel (0) target = $region49
    $region48: #{clip_get_text_features.1} parent=1 // pred_region
      %s2016 = ssub.s32 32, 32
      %2017 = vsyncadd [#allocation6], %s2016
      %s2019 = sshll.u32 [#allocation5], 4
      %s2020 = int_to_ptr.vmem [resolvable:$true] %s2019
      %2022 = dma.vmem_to_hbm [thread:$0]  %s2020, 32, %s12, [#allocation6]
    $region49: #{clip_get_text_features.1} parent=1 // pred_fallthru
      _
    // Predicated region
    $region50: #{clip_get_text_features.1} parent=1 // pred_check
      _
    $region51: #{clip_get_text_features.1} parent=1 // pred_check_branch
      %2024 = sbr.rel (0) target = $region53
    $region52: #{clip_get_text_features.1} parent=1 // pred_region
      %2025 = dma.done [#allocation6], 32
    $region53: #{clip_get_text_features.1} parent=1 // pred_fallthru
      _
    %2026 = vsyncpa [#allocation6], 1

</llo_original>
